<compile_context>
chip_gen: v5e
topology: v5e:2x2
jax: 0.10.0
libtpu: 0.0.40
codegen_flags: <defaults>
</compile_context>

<pallas_src>
import functools
import math

import jax
import jax.numpy as jnp
from jax.experimental import pallas as pl
from jax.experimental.pallas import tpu as pltpu


# ----------------------------------------------------------------------------
# Positional-encoding timing signal (pure function of shapes, host/XLA side)
# ----------------------------------------------------------------------------
def timing_signal(length, channels, min_timescale=1.0, max_timescale=10000.0):
    position = jnp.arange(length, dtype=jnp.float32)
    num_timescales = channels // 2
    log_inc = math.log(float(max_timescale) / float(min_timescale)) / (
        float(num_timescales) - 1.0
    )
    inv = min_timescale * jnp.exp(
        jnp.arange(num_timescales, dtype=jnp.float32) * -log_inc
    )
    scaled = position[:, None] * inv[None, :]
    signal = jnp.concatenate([jnp.sin(scaled), jnp.cos(scaled)], axis=1)
    if channels % 2:
        signal = jnp.pad(signal, ((0, 0), (0, channels % 2)))
    return signal  # (L, C)


# Packing order of the (12, D) "vecs" table:
#   3*i + 0 : LayerNorm gamma for conv block i      (i = 0, 1)
#   3*i + 1 : LayerNorm beta  for conv block i
#   3*i + 2 : pointwise-conv bias for conv block i
V_LN1_G, V_LN1_B = 6, 7
V_LN2_G, V_LN2_B = 8, 9
V_FFN1_B, V_FFN2_B = 10, 11


# ----------------------------------------------------------------------------
# Pallas kernel: one batch block per grid step, everything fused.
# ----------------------------------------------------------------------------
def selfmatching_kernel(
    sig_ref,      # (L, D)        positional timing signal, f32
    mask_ref,     # (bt, 1, L)    attention key mask (0/1), f32
    x_ref,        # (bt, D, L)    input batch block, NCL layout, f32
    dw_ref,       # (2, 5, D)     depthwise conv weights (block, tap, channel), f32
    pw_w_ref,     # (2, D, D)     pointwise conv weights (in, out), bf16
    qkv_w_ref,    # (D, 3D)       fused [Q*scale | K | V] projection, bf16
    ffn_w_ref,    # (2, D, D)     FFN weights, bf16
    vecs_ref,     # (12, D)       packed LayerNorm gammas/betas + biases, f32
    o_ref,        # (bt, D, L)    output batch block, NCL layout, f32
    *,
    num_head: int,
):
    bt, D, L = x_ref.shape
    n = bt * L
    hd = D // num_head
    eps = 1e-5

    def vec(i):                          # (1, D) row of the packed vector table
        return vecs_ref[i][None, :]

    def layernorm(x, g, b):              # one-pass mean / variance
        mu = jnp.mean(x, axis=-1, keepdims=True)
        var = jnp.mean(x * x, axis=-1, keepdims=True) - mu * mu
        return (x - mu) * jax.lax.rsqrt(var + eps) * g + b

    def mm(a, w):                        # bf16 MXU matmul, f32 accumulation
        return jnp.dot(a.astype(jnp.bfloat16), w,
                       preferred_element_type=jnp.float32)

    # ---- NCL -> NLD (in-kernel, replaces wrapper HBM-level transpose) ------
    x_ncl = x_ref[...]
    if bt == 1:
        x_ld = x_ncl[0].T.reshape(1, L, D)            # pure 2-D XLU transpose
    else:
        x_ld = jnp.swapaxes(x_ncl, 1, 2)              # (bt, L, D)

    # ---- PosEncoder: x + timing signal -------------------------------------
    out = (x_ld + sig_ref[...]).reshape(n, D)         # (n, D) f32

    # Edge-validity masks for the depthwise conv, computed IN-KERNEL with
    # iota (no captured array constants).  Flattened row r = b*L + l; tap
    # offset `off` is valid iff 0 <= l+off < L.  This also zeroes any
    # cross-batch / end-of-array wrap from the circular roll.
    offs = (-2, -1, 1, 2)
    l_idx = jax.lax.broadcasted_iota(jnp.int32, (n, 1), 0) % L
    valid = {
        off: ((l_idx + off >= 0) & (l_idx + off < L)).astype(jnp.float32)
        for off in offs
    }
    shift = {off: (-off) % n for off in offs}

    # ---- 2 x DepthwiseSeparableConv (pre-LN + residual) --------------------
    for i in range(2):
        res = out
        h = layernorm(out, vec(3 * i + 0), vec(3 * i + 1))
        taps = dw_ref[i]                                     # (5, D) f32
        tap_w = [taps[t][None, :] for t in range(5)]         # hoisted broadcasts
        acc = h * tap_w[2]                                   # center tap
        for t, off in ((0, -2), (1, -1), (3, 1), (4, 2)):
            # rolled[r] = h[r + off]   (jnp.roll semantics, XLU sublane rotate)
            rolled = pltpu.roll(h, shift=shift[off], axis=0)
            acc = acc + rolled * valid[off] * tap_w[t]
        pw = mm(acc, pw_w_ref[i]) + vec(3 * i + 2)           # 1x1 conv + bias
        out = jnp.maximum(pw, 0.0) + res

    # ---- Self-attention -----------------------------------------------------
    res = out
    hln = layernorm(out, vec(V_LN1_G), vec(V_LN1_B))
    qkv = mm(hln, qkv_w_ref[...])                            # (n, 3D) f32
    # Q columns were prescaled by hd^-0.5 at pack time.  Cast to bf16 ONCE.
    q3 = qkv[:, 0 * D:1 * D].reshape(bt, L, D).astype(jnp.bfloat16)
    k3 = qkv[:, 1 * D:2 * D].reshape(bt, L, D).astype(jnp.bfloat16)
    v3 = qkv[:, 2 * D:3 * D].reshape(bt, L, D).astype(jnp.bfloat16)

    # Additive key-mask bias, computed once per block: 0 where valid, -1e30
    # where masked (matches mask_logits for any row with >=1 valid key).
    key_bias = (mask_ref[...] - 1.0) * 1e30                  # (bt, 1, L) f32

    lane = jax.lax.broadcasted_iota(jnp.int32, (1, 1, D), 2)
    att = jnp.zeros((bt, L, D), jnp.float32)
    for hh in range(num_head):
        # 0/1 channel mask selecting head hh's contiguous hd-wide block.
        mh = ((lane >= hh * hd) & (lane < (hh + 1) * hd)).astype(jnp.bfloat16)
        # Logits: bt-batched MXU contraction over D (non-head columns of q
        # are zeroed, so only head hh contributes).
        logits = jax.lax.dot_general(
            q3 * mh, k3,
            dimension_numbers=(((2,), (2,)), ((0,), (0,))),
            preferred_element_type=jnp.float32)              # (bt, L, L)
        logits = logits + key_bias
        mx = jnp.max(logits, axis=-1, keepdims=True)
        e = jnp.exp(logits - mx)
        w = e * pl.reciprocal(jnp.sum(e, axis=-1, keepdims=True), approx=True)
        # Weighted values: masked V means only head hh's output columns are
        # written by this iteration -> accumulate, no concat needed.
        att = att + jax.lax.dot_general(
            w.astype(jnp.bfloat16), v3 * mh,
            dimension_numbers=(((2,), (1,)), ((0,), (0,))),
            preferred_element_type=jnp.float32)              # (bt, L, D)

    out = att.reshape(n, D) + res

    # ---- Feed-forward --------------------------------------------------------
    res = out
    hln = layernorm(out, vec(V_LN2_G), vec(V_LN2_B))
    f1 = jnp.maximum(mm(hln, ffn_w_ref[0]) + vec(V_FFN1_B), 0.0)
    out = mm(f1, ffn_w_ref[1]) + vec(V_FFN2_B) + res

    # ---- NLD -> NCL store ----------------------------------------------------
    out3 = out.reshape(bt, L, D)
    if bt == 1:
        o_ref[...] = out3[0].T.reshape(1, D, L).astype(o_ref.dtype)
    else:
        o_ref[...] = jnp.swapaxes(out3, 1, 2).astype(o_ref.dtype)


# ----------------------------------------------------------------------------
# Wrapper
# ----------------------------------------------------------------------------
def _pick_batch_tile(B, L):
    """Largest divisor of B with ~<=1024 rows per step AND nb = B//bt >= 2
    (when B >= 2) so the 'parallel' grid axis shards across v7x's two
    TensorCores and the pipeline has >=2 steps to overlap DMA with compute."""
    target = max(1, 1024 // max(L, 1))
    cap = min(B, target)
    if B >= 2:
        cap = min(cap, B // 2)
    cap = max(cap, 1)
    for bt in range(cap, 0, -1):
        if B % bt == 0:
            return bt
    return 1


def pack_params(params, num_head):
    """Pack per-layer tensors into the fused kernel layout (bf16 MXU weights).
    The 1/sqrt(hd) attention scale is folded into the Q weight columns."""
    D = params["q_w"].shape[0]
    hd = D // num_head
    scale = float(hd) ** -0.5
    qkv_w = jnp.concatenate(
        [params["q_w"] * scale, params["k_w"], params["v_w"]],
        axis=1).astype(jnp.bfloat16)
    ffn_w = jnp.stack(
        [params["ffn1_w"], params["ffn2_w"]], axis=0).astype(jnp.bfloat16)
    vecs = jnp.stack([
        params["lnC_g"][0, 0], params["lnC_b"][0, 0], params["pw_b"][0, 0],
        params["lnC_g"][1, 0], params["lnC_b"][1, 0], params["pw_b"][1, 0],
        params["ln1_g"][0], params["ln1_b"][0],
        params["ln2_g"][0], params["ln2_b"][0],
        params["ffn1_b"][0], params["ffn2_b"][0],
    ], axis=0).astype(jnp.float32)                            # (12, D)
    return {
        "dw": params["dw"].astype(jnp.float32),               # VPU work stays f32
        "pw_w": params["pw_w"].astype(jnp.bfloat16),
        "qkv_w": qkv_w,
        "ffn_w": ffn_w,
        "vecs": vecs,
    }


def self_matching(x_ncl, mask, params, num_head):
    """x_ncl: (B, D, L) float32 (PyTorch Conv1d layout); mask: (B, L)."""
    B, D, L = x_ncl.shape
    assert D % num_head == 0
    sig = timing_signal(L, D)                                    # (L, D)
    mask3 = mask.astype(jnp.float32).reshape(B, 1, L)
    p = pack_params(params, num_head)

    bt = _pick_batch_tile(B, L)
    nb = B // bt

    def full(shape):
        zeros = (0,) * len(shape)
        return pl.BlockSpec(shape, lambda b: zeros)

    per_block = pl.BlockSpec((bt, D, L), lambda b: (b, 0, 0))

    in_specs = [
        full((L, D)),                                   # sig
        pl.BlockSpec((bt, 1, L), lambda b: (b, 0, 0)),  # mask
        per_block,                                      # x (NCL)
        full((2, 5, D)),                                # dw
        full((2, D, D)),                                # pw_w
        full((D, 3 * D)),                               # qkv_w (fused Q|K|V)
        full((2, D, D)),                                # ffn_w
        full((12, D)),                                  # packed LN/bias vectors
    ]

    # Advisory cost estimate for XLA scheduling around the custom call.
    flops = int(2 * B * L * D * D * 7 + 4 * B * L * L * D)
    transcendentals = int(B * num_head * L * L + 5 * B * L)
    bytes_accessed = int(
        2 * B * D * L * 4 + B * L * 4
        + (L * D + 2 * 5 * D + 12 * D) * 4
        + (2 * D * D + 3 * D * D + 2 * D * D) * 2)

    # Explicit per-step VMEM budget (double-buffered blocks + resident weights
    # + f32 intermediates), capped so it is safe on v7x's 64 MiB VMEM.
    blk = bt * L * D * 4
    weight_bytes = (L * D + 2 * 5 * D + 12 * D) * 4 \
        + (2 * D * D + 3 * D * D + 2 * D * D) * 2
    inter = bt * L * D * 4 * 14 + bt * L * 3 * D * 4 + bt * L * L * 4 * 4
    est = 4 * blk + 2 * weight_bytes + inter
    vmem_limit = int(min(max(1.5 * est, 32 * 1024 * 1024), 48 * 1024 * 1024))

    out = pl.pallas_call(
        functools.partial(selfmatching_kernel, num_head=num_head),
        out_shape=jax.ShapeDtypeStruct((B, D, L), jnp.float32),
        grid_spec=pltpu.PrefetchScalarGridSpec(
            num_scalar_prefetch=0,
            grid=(nb,),
            in_specs=in_specs,
            out_specs=per_block,
        ),
        compiler_params=pltpu.CompilerParams(
            # batch-block axis: shards across the 2 TensorCores on v7x,
            # harmless no-op on v5e/v6e.
            dimension_semantics=("parallel",),
            vmem_limit_bytes=vmem_limit),
        cost_estimate=pl.CostEstimate(
            flops=flops, transcendentals=transcendentals,
            bytes_accessed=bytes_accessed),
    )(sig, mask3, x_ncl.astype(jnp.float32), p["dw"], p["pw_w"], p["qkv_w"],
      p["ffn_w"], p["vecs"])
    return out                                           # already (B, D, L)


# ----------------------------------------------------------------------------
# Deterministic parameter initialization (shapes from SelfMatching.__init__)
# ----------------------------------------------------------------------------
def init_params(key, d_model):
    D = d_model
    ks = jax.random.split(key, 8)
    n = lambda k, shape: (jax.random.normal(k, shape, jnp.float32) * 0.1)
    return {
        # 2 x DepthwiseSeparableConv(d_model, d_model, k=5)
        # "dw" is PyTorch depthwise weight (D, 1, 5) transposed to (tap, channel).
        "dw": n(ks[0], (2, 5, D)),
        "pw_w": n(ks[1], (2, D, D)),         # pointwise weights (in, out)
        "pw_b": jnp.zeros((2, 1, D), jnp.float32),
        "lnC_g": jnp.ones((2, 1, D), jnp.float32),
        "lnC_b": jnp.zeros((2, 1, D), jnp.float32),
        # SelfAttention: mem_conv (D -> 2D, split into K/V) and query_conv
        "k_w": n(ks[2], (D, D)),
        "v_w": n(ks[3], (D, D)),
        "q_w": n(ks[4], (D, D)),
        "ln1_g": jnp.ones((1, D), jnp.float32),
        "ln1_b": jnp.zeros((1, D), jnp.float32),
        # FFN
        "ffn1_w": n(ks[5], (D, D)),
        "ffn1_b": jnp.zeros((1, D), jnp.float32),
        "ffn2_w": n(ks[6], (D, D)),
        "ffn2_b": jnp.zeros((1, D), jnp.float32),
        "ln2_g": jnp.ones((1, D), jnp.float32),
        "ln2_b": jnp.zeros((1, D), jnp.float32),
    }


if __name__ == "__main__":
    B, D, L, H = 2, 32, 16, 4   # batch, d_model, seq_len, num_head

    key = jax.random.PRNGKey(0)
    kx, kp = jax.random.split(key)
    x = jax.random.normal(kx, (B, D, L), jnp.float32)     # PyTorch NCL layout
    lengths = jnp.array([16, 12], dtype=jnp.int32)
    mask = (jnp.arange(L)[None, :] < lengths[:, None]).astype(jnp.float32)  # (B, L)

    params = init_params(kp, D)

    out = self_matching(x, mask, params, num_head=H)
    out = jax.block_until_ready(out)

    assert out.shape == (B, D, L)
    assert bool(jnp.all(jnp.isfinite(out)))
    print("KERNEL_OK")
</pallas_src>

<mosaic_0001>
module attributes {stable_mosaic.version = 11 : i64} {
  func.func @selfmatching_kernel(%arg0: i32, %arg1: memref<16x32xf32, #tpu.memory_space<vmem>>, %arg2: memref<1x1x16xf32, #tpu.memory_space<vmem>>, %arg3: memref<1x32x16xf32, #tpu.memory_space<vmem>>, %arg4: memref<2x5x32xf32, #tpu.memory_space<vmem>>, %arg5: memref<2x32x32xbf16, #tpu.memory_space<vmem>>, %arg6: memref<32x96xbf16, #tpu.memory_space<vmem>>, %arg7: memref<2x32x32xbf16, #tpu.memory_space<vmem>>, %arg8: memref<12x32xf32, #tpu.memory_space<vmem>>, %arg9: memref<1x32x16xf32, #tpu.memory_space<vmem>>) attributes {dimension_semantics = [#tpu.dimension_semantics<parallel>], iteration_bounds = array<i64: 2>, scalar_prefetch = 0 : i64, scratch_operands = 0 : i64, tpu.core_type = #tpu.core_type<tc>, window_params = [{pipeline_mode = #tpu.pipeline_mode<synchronous>, transform_indices = @transform_0, window_bounds = array<i64: 16, 32>}, {transform_indices = @transform_1, window_bounds = array<i64: 1, 1, 16>}, {transform_indices = @transform_2, window_bounds = array<i64: 1, 32, 16>}, {pipeline_mode = #tpu.pipeline_mode<synchronous>, transform_indices = @transform_3, window_bounds = array<i64: 2, 5, 32>}, {pipeline_mode = #tpu.pipeline_mode<synchronous>, transform_indices = @transform_4, window_bounds = array<i64: 2, 32, 32>}, {pipeline_mode = #tpu.pipeline_mode<synchronous>, transform_indices = @transform_5, window_bounds = array<i64: 32, 96>}, {pipeline_mode = #tpu.pipeline_mode<synchronous>, transform_indices = @transform_6, window_bounds = array<i64: 2, 32, 32>}, {pipeline_mode = #tpu.pipeline_mode<synchronous>, transform_indices = @transform_7, window_bounds = array<i64: 12, 32>}, {transform_indices = @transform_8, window_bounds = array<i64: 1, 32, 16>}]} {
    %c0 = arith.constant 0 : index
    %c0_0 = arith.constant 0 : index
    %c0_1 = arith.constant 0 : index
    %0 = vector.load %arg3[%c0, %c0_0, %c0_1] : memref<1x32x16xf32, #tpu.memory_space<vmem>>, vector<1x32x16xf32>
    %1 = vector.shape_cast %0 : vector<1x32x16xf32> to vector<32x16xf32>
    %2 = tpu.transpose %1, [1, 0] : vector<32x16xf32> -> vector<16x32xf32>
    %3 = vector.shape_cast %2 : vector<16x32xf32> to vector<1x16x32xf32>
    %c0_2 = arith.constant 0 : index
    %c0_3 = arith.constant 0 : index
    %4 = vector.load %arg1[%c0_2, %c0_3] : memref<16x32xf32, #tpu.memory_space<vmem>>, vector<16x32xf32>
    %5 = vector.shape_cast %4 : vector<16x32xf32> to vector<1x16x32xf32>
    %6 = arith.addf %3, %5 : vector<1x16x32xf32>
    %7 = vector.shape_cast %6 : vector<1x16x32xf32> to vector<16x32xf32>
    %8 = tpu.iota {dimensions = array<i32: 0>} : vector<16x1xi32>
    %c16_i32 = arith.constant 16 : i32
    %c0_i32 = arith.constant 0 : i32
    %9 = arith.cmpi eq, %c16_i32, %c0_i32 : i32
    %c1_i32 = arith.constant 1 : i32
    %10 = arith.select %9, %c1_i32, %c16_i32 : i32
    %11 = vector.broadcast %10 : i32 to vector<16x1xi32>
    %12 = arith.remsi %8, %11 : vector<16x1xi32>
    %c0_i32_4 = arith.constant 0 : i32
    %13 = vector.broadcast %c0_i32_4 : i32 to vector<16x1xi32>
    %14 = arith.cmpi ne, %12, %13 : vector<16x1xi32>
    %c0_i32_5 = arith.constant 0 : i32
    %15 = vector.broadcast %c0_i32_5 : i32 to vector<16x1xi32>
    %16 = arith.cmpi slt, %12, %15 : vector<16x1xi32>
    %c0_i32_6 = arith.constant 0 : i32
    %17 = arith.cmpi slt, %10, %c0_i32_6 : i32
    %18 = vector.broadcast %17 : i1 to vector<16x1xi1>
    %19 = vector.broadcast %18 : vector<16x1xi1> to vector<16x1xi1>
    %20 = arith.xori %16, %19 : vector<16x1xi1>
    %21 = arith.andi %20, %14 : vector<16x1xi1>
    %22 = vector.broadcast %10 : i32 to vector<16x1xi32>
    %23 = arith.addi %12, %22 : vector<16x1xi32>
    %24 = arith.select %21, %23, %12 : vector<16x1xi1>, vector<16x1xi32>
    %c-2_i32 = arith.constant -2 : i32
    %25 = vector.broadcast %c-2_i32 : i32 to vector<16x1xi32>
    %26 = arith.addi %24, %25 : vector<16x1xi32>
    %c0_i32_7 = arith.constant 0 : i32
    %27 = vector.broadcast %c0_i32_7 : i32 to vector<16x1xi32>
    %28 = arith.cmpi sge, %26, %27 : vector<16x1xi32>
    %c-2_i32_8 = arith.constant -2 : i32
    %29 = vector.broadcast %c-2_i32_8 : i32 to vector<16x1xi32>
    %30 = arith.addi %24, %29 : vector<16x1xi32>
    %c16_i32_9 = arith.constant 16 : i32
    %31 = vector.broadcast %c16_i32_9 : i32 to vector<16x1xi32>
    %32 = arith.cmpi slt, %30, %31 : vector<16x1xi32>
    %33 = arith.andi %28, %32 : vector<16x1xi1>
    %34 = arith.extui %33 : vector<16x1xi1> to vector<16x1xi32>
    %35 = arith.sitofp %34 : vector<16x1xi32> to vector<16x1xf32>
    %c-1_i32 = arith.constant -1 : i32
    %36 = vector.broadcast %c-1_i32 : i32 to vector<16x1xi32>
    %37 = arith.addi %24, %36 : vector<16x1xi32>
    %c0_i32_10 = arith.constant 0 : i32
    %38 = vector.broadcast %c0_i32_10 : i32 to vector<16x1xi32>
    %39 = arith.cmpi sge, %37, %38 : vector<16x1xi32>
    %c-1_i32_11 = arith.constant -1 : i32
    %40 = vector.broadcast %c-1_i32_11 : i32 to vector<16x1xi32>
    %41 = arith.addi %24, %40 : vector<16x1xi32>
    %c16_i32_12 = arith.constant 16 : i32
    %42 = vector.broadcast %c16_i32_12 : i32 to vector<16x1xi32>
    %43 = arith.cmpi slt, %41, %42 : vector<16x1xi32>
    %44 = arith.andi %39, %43 : vector<16x1xi1>
    %45 = arith.extui %44 : vector<16x1xi1> to vector<16x1xi32>
    %46 = arith.sitofp %45 : vector<16x1xi32> to vector<16x1xf32>
    %c1_i32_13 = arith.constant 1 : i32
    %47 = vector.broadcast %c1_i32_13 : i32 to vector<16x1xi32>
    %48 = arith.addi %24, %47 : vector<16x1xi32>
    %c0_i32_14 = arith.constant 0 : i32
    %49 = vector.broadcast %c0_i32_14 : i32 to vector<16x1xi32>
    %50 = arith.cmpi sge, %48, %49 : vector<16x1xi32>
    %c1_i32_15 = arith.constant 1 : i32
    %51 = vector.broadcast %c1_i32_15 : i32 to vector<16x1xi32>
    %52 = arith.addi %24, %51 : vector<16x1xi32>
    %c16_i32_16 = arith.constant 16 : i32
    %53 = vector.broadcast %c16_i32_16 : i32 to vector<16x1xi32>
    %54 = arith.cmpi slt, %52, %53 : vector<16x1xi32>
    %55 = arith.andi %50, %54 : vector<16x1xi1>
    %56 = arith.extui %55 : vector<16x1xi1> to vector<16x1xi32>
    %57 = arith.sitofp %56 : vector<16x1xi32> to vector<16x1xf32>
    %c2_i32 = arith.constant 2 : i32
    %58 = vector.broadcast %c2_i32 : i32 to vector<16x1xi32>
    %59 = arith.addi %24, %58 : vector<16x1xi32>
    %c0_i32_17 = arith.constant 0 : i32
    %60 = vector.broadcast %c0_i32_17 : i32 to vector<16x1xi32>
    %61 = arith.cmpi sge, %59, %60 : vector<16x1xi32>
    %c2_i32_18 = arith.constant 2 : i32
    %62 = vector.broadcast %c2_i32_18 : i32 to vector<16x1xi32>
    %63 = arith.addi %24, %62 : vector<16x1xi32>
    %c16_i32_19 = arith.constant 16 : i32
    %64 = vector.broadcast %c16_i32_19 : i32 to vector<16x1xi32>
    %65 = arith.cmpi slt, %63, %64 : vector<16x1xi32>
    %66 = arith.andi %61, %65 : vector<16x1xi1>
    %67 = arith.extui %66 : vector<16x1xi1> to vector<16x1xi32>
    %68 = arith.sitofp %67 : vector<16x1xi32> to vector<16x1xf32>
    %c0_20 = arith.constant 0 : index
    %c0_21 = arith.constant 0 : index
    %69 = vector.load %arg8[%c0_20, %c0_21] : memref<12x32xf32, #tpu.memory_space<vmem>>, vector<1x32xf32>
    %70 = vector.shape_cast %69 : vector<1x32xf32> to vector<32xf32>
    %71 = vector.shape_cast %70 : vector<32xf32> to vector<1x32xf32>
    %c1 = arith.constant 1 : index
    %c0_22 = arith.constant 0 : index
    %72 = vector.load %arg8[%c1, %c0_22] : memref<12x32xf32, #tpu.memory_space<vmem>>, vector<1x32xf32>
    %73 = vector.shape_cast %72 : vector<1x32xf32> to vector<32xf32>
    %74 = vector.shape_cast %73 : vector<32xf32> to vector<1x32xf32>
    %cst = arith.constant dense<0.000000e+00> : vector<16xf32>
    %75 = vector.multi_reduction <add>, %7, %cst [1] : vector<16x32xf32> to vector<16xf32>
    %76 = vector.shape_cast %75 : vector<16xf32> to vector<16x1xf32>
    %cst_23 = arith.constant 3.200000e+01 : f32
    %77 = vector.broadcast %cst_23 : f32 to vector<16x1xf32>
    %78 = arith.divf %76, %77 : vector<16x1xf32>
    %79 = arith.mulf %7, %7 : vector<16x32xf32>
    %cst_24 = arith.constant dense<0.000000e+00> : vector<16xf32>
    %80 = vector.multi_reduction <add>, %79, %cst_24 [1] : vector<16x32xf32> to vector<16xf32>
    %81 = vector.shape_cast %80 : vector<16xf32> to vector<16x1xf32>
    %cst_25 = arith.constant 3.200000e+01 : f32
    %82 = vector.broadcast %cst_25 : f32 to vector<16x1xf32>
    %83 = arith.divf %81, %82 : vector<16x1xf32>
    %84 = arith.mulf %78, %78 : vector<16x1xf32>
    %85 = arith.subf %83, %84 : vector<16x1xf32>
    %86 = vector.broadcast %78 : vector<16x1xf32> to vector<16x32xf32>
    %87 = arith.subf %7, %86 : vector<16x32xf32>
    %cst_26 = arith.constant 9.99999974E-6 : f32
    %88 = vector.broadcast %cst_26 : f32 to vector<16x1xf32>
    %89 = arith.addf %85, %88 : vector<16x1xf32>
    %90 = math.rsqrt %89 : vector<16x1xf32>
    %91 = vector.broadcast %90 : vector<16x1xf32> to vector<16x32xf32>
    %92 = arith.mulf %87, %91 : vector<16x32xf32>
    %93 = vector.broadcast %71 : vector<1x32xf32> to vector<16x32xf32>
    %94 = arith.mulf %92, %93 : vector<16x32xf32>
    %95 = vector.broadcast %74 : vector<1x32xf32> to vector<16x32xf32>
    %96 = arith.addf %94, %95 : vector<16x32xf32>
    %c0_27 = arith.constant 0 : index
    %c0_28 = arith.constant 0 : index
    %c0_29 = arith.constant 0 : index
    %97 = vector.load %arg4[%c0_27, %c0_28, %c0_29] : memref<2x5x32xf32, #tpu.memory_space<vmem>>, vector<1x5x32xf32>
    %98 = vector.shape_cast %97 : vector<1x5x32xf32> to vector<5x32xf32>
    %99 = vector.extract_strided_slice %98 {offsets = [0, 0], sizes = [1, 32], strides = [1, 1]} : vector<5x32xf32> to vector<1x32xf32>
    %100 = vector.shape_cast %99 : vector<1x32xf32> to vector<32xf32>
    %101 = vector.shape_cast %100 : vector<32xf32> to vector<1x32xf32>
    %102 = vector.extract_strided_slice %98 {offsets = [1, 0], sizes = [1, 32], strides = [1, 1]} : vector<5x32xf32> to vector<1x32xf32>
    %103 = vector.shape_cast %102 : vector<1x32xf32> to vector<32xf32>
    %104 = vector.shape_cast %103 : vector<32xf32> to vector<1x32xf32>
    %105 = vector.extract_strided_slice %98 {offsets = [2, 0], sizes = [1, 32], strides = [1, 1]} : vector<5x32xf32> to vector<1x32xf32>
    %106 = vector.shape_cast %105 : vector<1x32xf32> to vector<32xf32>
    %107 = vector.shape_cast %106 : vector<32xf32> to vector<1x32xf32>
    %108 = vector.extract_strided_slice %98 {offsets = [3, 0], sizes = [1, 32], strides = [1, 1]} : vector<5x32xf32> to vector<1x32xf32>
    %109 = vector.shape_cast %108 : vector<1x32xf32> to vector<32xf32>
    %110 = vector.shape_cast %109 : vector<32xf32> to vector<1x32xf32>
    %111 = vector.extract_strided_slice %98 {offsets = [4, 0], sizes = [1, 32], strides = [1, 1]} : vector<5x32xf32> to vector<1x32xf32>
    %112 = vector.shape_cast %111 : vector<1x32xf32> to vector<32xf32>
    %113 = vector.shape_cast %112 : vector<32xf32> to vector<1x32xf32>
    %114 = vector.broadcast %107 : vector<1x32xf32> to vector<16x32xf32>
    %115 = arith.mulf %96, %114 : vector<16x32xf32>
    %c2_i32_30 = arith.constant 2 : i32
    %116 = tpu.dynamic_rotate %96 by %c2_i32_30 dim 0 : vector<16x32xf32>, i32 -> vector<16x32xf32>
    %117 = vector.broadcast %35 : vector<16x1xf32> to vector<16x32xf32>
    %118 = arith.mulf %116, %117 : vector<16x32xf32>
    %119 = vector.broadcast %101 : vector<1x32xf32> to vector<16x32xf32>
    %120 = arith.mulf %118, %119 : vector<16x32xf32>
    %121 = arith.addf %115, %120 : vector<16x32xf32>
    %c1_i32_31 = arith.constant 1 : i32
    %122 = tpu.dynamic_rotate %96 by %c1_i32_31 dim 0 : vector<16x32xf32>, i32 -> vector<16x32xf32>
    %123 = vector.broadcast %46 : vector<16x1xf32> to vector<16x32xf32>
    %124 = arith.mulf %122, %123 : vector<16x32xf32>
    %125 = vector.broadcast %104 : vector<1x32xf32> to vector<16x32xf32>
    %126 = arith.mulf %124, %125 : vector<16x32xf32>
    %127 = arith.addf %121, %126 : vector<16x32xf32>
    %c15_i32 = arith.constant 15 : i32
    %128 = tpu.dynamic_rotate %96 by %c15_i32 dim 0 : vector<16x32xf32>, i32 -> vector<16x32xf32>
    %129 = vector.broadcast %57 : vector<16x1xf32> to vector<16x32xf32>
    %130 = arith.mulf %128, %129 : vector<16x32xf32>
    %131 = vector.broadcast %110 : vector<1x32xf32> to vector<16x32xf32>
    %132 = arith.mulf %130, %131 : vector<16x32xf32>
    %133 = arith.addf %127, %132 : vector<16x32xf32>
    %c14_i32 = arith.constant 14 : i32
    %134 = tpu.dynamic_rotate %96 by %c14_i32 dim 0 : vector<16x32xf32>, i32 -> vector<16x32xf32>
    %135 = vector.broadcast %68 : vector<16x1xf32> to vector<16x32xf32>
    %136 = arith.mulf %134, %135 : vector<16x32xf32>
    %137 = vector.broadcast %113 : vector<1x32xf32> to vector<16x32xf32>
    %138 = arith.mulf %136, %137 : vector<16x32xf32>
    %139 = arith.addf %133, %138 : vector<16x32xf32>
    %c0_32 = arith.constant 0 : index
    %c0_33 = arith.constant 0 : index
    %c0_34 = arith.constant 0 : index
    %140 = vector.load %arg5[%c0_32, %c0_33, %c0_34] : memref<2x32x32xbf16, #tpu.memory_space<vmem>>, vector<1x32x32xbf16>
    %141 = vector.shape_cast %140 : vector<1x32x32xbf16> to vector<32x32xbf16>
    %142 = arith.truncf %139 : vector<16x32xf32> to vector<16x32xbf16>
    %cst_35 = arith.constant dense<0.000000e+00> : vector<16x32xf32>
    %143 = tpu.matmul %142, %141, %cst_35 {dimension_numbers = #tpu.dot_dimension_numbers<[1], [0], [0], [1], [0, 0, 1, 1], [], []>} : vector<16x32xbf16>, vector<32x32xbf16>, vector<16x32xf32> -> vector<16x32xf32>
    %c2 = arith.constant 2 : index
    %c0_36 = arith.constant 0 : index
    %144 = vector.load %arg8[%c2, %c0_36] : memref<12x32xf32, #tpu.memory_space<vmem>>, vector<1x32xf32>
    %145 = vector.shape_cast %144 : vector<1x32xf32> to vector<32xf32>
    %146 = vector.shape_cast %145 : vector<32xf32> to vector<1x32xf32>
    %147 = vector.broadcast %146 : vector<1x32xf32> to vector<16x32xf32>
    %148 = arith.addf %143, %147 : vector<16x32xf32>
    %cst_37 = arith.constant 0.000000e+00 : f32
    %149 = vector.broadcast %cst_37 : f32 to vector<16x32xf32>
    %150 = arith.maximumf %148, %149 : vector<16x32xf32>
    %151 = arith.addf %150, %7 : vector<16x32xf32>
    %c3 = arith.constant 3 : index
    %c0_38 = arith.constant 0 : index
    %152 = vector.load %arg8[%c3, %c0_38] : memref<12x32xf32, #tpu.memory_space<vmem>>, vector<1x32xf32>
    %153 = vector.shape_cast %152 : vector<1x32xf32> to vector<32xf32>
    %154 = vector.shape_cast %153 : vector<32xf32> to vector<1x32xf32>
    %c4 = arith.constant 4 : index
    %c0_39 = arith.constant 0 : index
    %155 = vector.load %arg8[%c4, %c0_39] : memref<12x32xf32, #tpu.memory_space<vmem>>, vector<1x32xf32>
    %156 = vector.shape_cast %155 : vector<1x32xf32> to vector<32xf32>
    %157 = vector.shape_cast %156 : vector<32xf32> to vector<1x32xf32>
    %cst_40 = arith.constant dense<0.000000e+00> : vector<16xf32>
    %158 = vector.multi_reduction <add>, %151, %cst_40 [1] : vector<16x32xf32> to vector<16xf32>
    %159 = vector.shape_cast %158 : vector<16xf32> to vector<16x1xf32>
    %cst_41 = arith.constant 3.200000e+01 : f32
    %160 = vector.broadcast %cst_41 : f32 to vector<16x1xf32>
    %161 = arith.divf %159, %160 : vector<16x1xf32>
    %162 = arith.mulf %151, %151 : vector<16x32xf32>
    %cst_42 = arith.constant dense<0.000000e+00> : vector<16xf32>
    %163 = vector.multi_reduction <add>, %162, %cst_42 [1] : vector<16x32xf32> to vector<16xf32>
    %164 = vector.shape_cast %163 : vector<16xf32> to vector<16x1xf32>
    %cst_43 = arith.constant 3.200000e+01 : f32
    %165 = vector.broadcast %cst_43 : f32 to vector<16x1xf32>
    %166 = arith.divf %164, %165 : vector<16x1xf32>
    %167 = arith.mulf %161, %161 : vector<16x1xf32>
    %168 = arith.subf %166, %167 : vector<16x1xf32>
    %169 = vector.broadcast %161 : vector<16x1xf32> to vector<16x32xf32>
    %170 = arith.subf %151, %169 : vector<16x32xf32>
    %cst_44 = arith.constant 9.99999974E-6 : f32
    %171 = vector.broadcast %cst_44 : f32 to vector<16x1xf32>
    %172 = arith.addf %168, %171 : vector<16x1xf32>
    %173 = math.rsqrt %172 : vector<16x1xf32>
    %174 = vector.broadcast %173 : vector<16x1xf32> to vector<16x32xf32>
    %175 = arith.mulf %170, %174 : vector<16x32xf32>
    %176 = vector.broadcast %154 : vector<1x32xf32> to vector<16x32xf32>
    %177 = arith.mulf %175, %176 : vector<16x32xf32>
    %178 = vector.broadcast %157 : vector<1x32xf32> to vector<16x32xf32>
    %179 = arith.addf %177, %178 : vector<16x32xf32>
    %c1_45 = arith.constant 1 : index
    %c0_46 = arith.constant 0 : index
    %c0_47 = arith.constant 0 : index
    %180 = vector.load %arg4[%c1_45, %c0_46, %c0_47] : memref<2x5x32xf32, #tpu.memory_space<vmem>>, vector<1x5x32xf32>
    %181 = vector.shape_cast %180 : vector<1x5x32xf32> to vector<5x32xf32>
    %182 = vector.extract_strided_slice %181 {offsets = [0, 0], sizes = [1, 32], strides = [1, 1]} : vector<5x32xf32> to vector<1x32xf32>
    %183 = vector.shape_cast %182 : vector<1x32xf32> to vector<32xf32>
    %184 = vector.shape_cast %183 : vector<32xf32> to vector<1x32xf32>
    %185 = vector.extract_strided_slice %181 {offsets = [1, 0], sizes = [1, 32], strides = [1, 1]} : vector<5x32xf32> to vector<1x32xf32>
    %186 = vector.shape_cast %185 : vector<1x32xf32> to vector<32xf32>
    %187 = vector.shape_cast %186 : vector<32xf32> to vector<1x32xf32>
    %188 = vector.extract_strided_slice %181 {offsets = [2, 0], sizes = [1, 32], strides = [1, 1]} : vector<5x32xf32> to vector<1x32xf32>
    %189 = vector.shape_cast %188 : vector<1x32xf32> to vector<32xf32>
    %190 = vector.shape_cast %189 : vector<32xf32> to vector<1x32xf32>
    %191 = vector.extract_strided_slice %181 {offsets = [3, 0], sizes = [1, 32], strides = [1, 1]} : vector<5x32xf32> to vector<1x32xf32>
    %192 = vector.shape_cast %191 : vector<1x32xf32> to vector<32xf32>
    %193 = vector.shape_cast %192 : vector<32xf32> to vector<1x32xf32>
    %194 = vector.extract_strided_slice %181 {offsets = [4, 0], sizes = [1, 32], strides = [1, 1]} : vector<5x32xf32> to vector<1x32xf32>
    %195 = vector.shape_cast %194 : vector<1x32xf32> to vector<32xf32>
    %196 = vector.shape_cast %195 : vector<32xf32> to vector<1x32xf32>
    %197 = vector.broadcast %190 : vector<1x32xf32> to vector<16x32xf32>
    %198 = arith.mulf %179, %197 : vector<16x32xf32>
    %c2_i32_48 = arith.constant 2 : i32
    %199 = tpu.dynamic_rotate %179 by %c2_i32_48 dim 0 : vector<16x32xf32>, i32 -> vector<16x32xf32>
    %200 = vector.broadcast %35 : vector<16x1xf32> to vector<16x32xf32>
    %201 = arith.mulf %199, %200 : vector<16x32xf32>
    %202 = vector.broadcast %184 : vector<1x32xf32> to vector<16x32xf32>
    %203 = arith.mulf %201, %202 : vector<16x32xf32>
    %204 = arith.addf %198, %203 : vector<16x32xf32>
    %c1_i32_49 = arith.constant 1 : i32
    %205 = tpu.dynamic_rotate %179 by %c1_i32_49 dim 0 : vector<16x32xf32>, i32 -> vector<16x32xf32>
    %206 = vector.broadcast %46 : vector<16x1xf32> to vector<16x32xf32>
    %207 = arith.mulf %205, %206 : vector<16x32xf32>
    %208 = vector.broadcast %187 : vector<1x32xf32> to vector<16x32xf32>
    %209 = arith.mulf %207, %208 : vector<16x32xf32>
    %210 = arith.addf %204, %209 : vector<16x32xf32>
    %c15_i32_50 = arith.constant 15 : i32
    %211 = tpu.dynamic_rotate %179 by %c15_i32_50 dim 0 : vector<16x32xf32>, i32 -> vector<16x32xf32>
    %212 = vector.broadcast %57 : vector<16x1xf32> to vector<16x32xf32>
    %213 = arith.mulf %211, %212 : vector<16x32xf32>
    %214 = vector.broadcast %193 : vector<1x32xf32> to vector<16x32xf32>
    %215 = arith.mulf %213, %214 : vector<16x32xf32>
    %216 = arith.addf %210, %215 : vector<16x32xf32>
    %c14_i32_51 = arith.constant 14 : i32
    %217 = tpu.dynamic_rotate %179 by %c14_i32_51 dim 0 : vector<16x32xf32>, i32 -> vector<16x32xf32>
    %218 = vector.broadcast %68 : vector<16x1xf32> to vector<16x32xf32>
    %219 = arith.mulf %217, %218 : vector<16x32xf32>
    %220 = vector.broadcast %196 : vector<1x32xf32> to vector<16x32xf32>
    %221 = arith.mulf %219, %220 : vector<16x32xf32>
    %222 = arith.addf %216, %221 : vector<16x32xf32>
    %c1_52 = arith.constant 1 : index
    %c0_53 = arith.constant 0 : index
    %c0_54 = arith.constant 0 : index
    %223 = vector.load %arg5[%c1_52, %c0_53, %c0_54] : memref<2x32x32xbf16, #tpu.memory_space<vmem>>, vector<1x32x32xbf16>
    %224 = vector.shape_cast %223 : vector<1x32x32xbf16> to vector<32x32xbf16>
    %225 = arith.truncf %222 : vector<16x32xf32> to vector<16x32xbf16>
    %cst_55 = arith.constant dense<0.000000e+00> : vector<16x32xf32>
    %226 = tpu.matmul %225, %224, %cst_55 {dimension_numbers = #tpu.dot_dimension_numbers<[1], [0], [0], [1], [0, 0, 1, 1], [], []>} : vector<16x32xbf16>, vector<32x32xbf16>, vector<16x32xf32> -> vector<16x32xf32>
    %c5 = arith.constant 5 : index
    %c0_56 = arith.constant 0 : index
    %227 = vector.load %arg8[%c5, %c0_56] : memref<12x32xf32, #tpu.memory_space<vmem>>, vector<1x32xf32>
    %228 = vector.shape_cast %227 : vector<1x32xf32> to vector<32xf32>
    %229 = vector.shape_cast %228 : vector<32xf32> to vector<1x32xf32>
    %230 = vector.broadcast %229 : vector<1x32xf32> to vector<16x32xf32>
    %231 = arith.addf %226, %230 : vector<16x32xf32>
    %cst_57 = arith.constant 0.000000e+00 : f32
    %232 = vector.broadcast %cst_57 : f32 to vector<16x32xf32>
    %233 = arith.maximumf %231, %232 : vector<16x32xf32>
    %234 = arith.addf %233, %151 : vector<16x32xf32>
    %c6 = arith.constant 6 : index
    %c0_58 = arith.constant 0 : index
    %235 = vector.load %arg8[%c6, %c0_58] : memref<12x32xf32, #tpu.memory_space<vmem>>, vector<1x32xf32>
    %236 = vector.shape_cast %235 : vector<1x32xf32> to vector<32xf32>
    %237 = vector.shape_cast %236 : vector<32xf32> to vector<1x32xf32>
    %c7 = arith.constant 7 : index
    %c0_59 = arith.constant 0 : index
    %238 = vector.load %arg8[%c7, %c0_59] : memref<12x32xf32, #tpu.memory_space<vmem>>, vector<1x32xf32>
    %239 = vector.shape_cast %238 : vector<1x32xf32> to vector<32xf32>
    %240 = vector.shape_cast %239 : vector<32xf32> to vector<1x32xf32>
    %cst_60 = arith.constant dense<0.000000e+00> : vector<16xf32>
    %241 = vector.multi_reduction <add>, %234, %cst_60 [1] : vector<16x32xf32> to vector<16xf32>
    %242 = vector.shape_cast %241 : vector<16xf32> to vector<16x1xf32>
    %cst_61 = arith.constant 3.200000e+01 : f32
    %243 = vector.broadcast %cst_61 : f32 to vector<16x1xf32>
    %244 = arith.divf %242, %243 : vector<16x1xf32>
    %245 = arith.mulf %234, %234 : vector<16x32xf32>
    %cst_62 = arith.constant dense<0.000000e+00> : vector<16xf32>
    %246 = vector.multi_reduction <add>, %245, %cst_62 [1] : vector<16x32xf32> to vector<16xf32>
    %247 = vector.shape_cast %246 : vector<16xf32> to vector<16x1xf32>
    %cst_63 = arith.constant 3.200000e+01 : f32
    %248 = vector.broadcast %cst_63 : f32 to vector<16x1xf32>
    %249 = arith.divf %247, %248 : vector<16x1xf32>
    %250 = arith.mulf %244, %244 : vector<16x1xf32>
    %251 = arith.subf %249, %250 : vector<16x1xf32>
    %252 = vector.broadcast %244 : vector<16x1xf32> to vector<16x32xf32>
    %253 = arith.subf %234, %252 : vector<16x32xf32>
    %cst_64 = arith.constant 9.99999974E-6 : f32
    %254 = vector.broadcast %cst_64 : f32 to vector<16x1xf32>
    %255 = arith.addf %251, %254 : vector<16x1xf32>
    %256 = math.rsqrt %255 : vector<16x1xf32>
    %257 = vector.broadcast %256 : vector<16x1xf32> to vector<16x32xf32>
    %258 = arith.mulf %253, %257 : vector<16x32xf32>
    %259 = vector.broadcast %237 : vector<1x32xf32> to vector<16x32xf32>
    %260 = arith.mulf %258, %259 : vector<16x32xf32>
    %261 = vector.broadcast %240 : vector<1x32xf32> to vector<16x32xf32>
    %262 = arith.addf %260, %261 : vector<16x32xf32>
    %c0_65 = arith.constant 0 : index
    %c0_66 = arith.constant 0 : index
    %263 = vector.load %arg6[%c0_65, %c0_66] : memref<32x96xbf16, #tpu.memory_space<vmem>>, vector<32x96xbf16>
    %264 = arith.truncf %262 : vector<16x32xf32> to vector<16x32xbf16>
    %cst_67 = arith.constant dense<0.000000e+00> : vector<16x96xf32>
    %265 = tpu.matmul %264, %263, %cst_67 {dimension_numbers = #tpu.dot_dimension_numbers<[1], [0], [0], [1], [0, 0, 1, 1], [], []>} : vector<16x32xbf16>, vector<32x96xbf16>, vector<16x96xf32> -> vector<16x96xf32>
    %266 = vector.extract_strided_slice %265 {offsets = [0, 0], sizes = [16, 32], strides = [1, 1]} : vector<16x96xf32> to vector<16x32xf32>
    %267 = vector.shape_cast %266 : vector<16x32xf32> to vector<1x16x32xf32>
    %268 = arith.truncf %267 : vector<1x16x32xf32> to vector<1x16x32xbf16>
    %269 = vector.extract_strided_slice %265 {offsets = [0, 32], sizes = [16, 32], strides = [1, 1]} : vector<16x96xf32> to vector<16x32xf32>
    %270 = vector.shape_cast %269 : vector<16x32xf32> to vector<1x16x32xf32>
    %271 = arith.truncf %270 : vector<1x16x32xf32> to vector<1x16x32xbf16>
    %272 = vector.extract_strided_slice %265 {offsets = [0, 64], sizes = [16, 32], strides = [1, 1]} : vector<16x96xf32> to vector<16x32xf32>
    %273 = vector.shape_cast %272 : vector<16x32xf32> to vector<1x16x32xf32>
    %274 = arith.truncf %273 : vector<1x16x32xf32> to vector<1x16x32xbf16>
    %c0_68 = arith.constant 0 : index
    %c0_69 = arith.constant 0 : index
    %c0_70 = arith.constant 0 : index
    %275 = vector.load %arg2[%c0_68, %c0_69, %c0_70] : memref<1x1x16xf32, #tpu.memory_space<vmem>>, vector<1x1x16xf32>
    %cst_71 = arith.constant 1.000000e+00 : f32
    %276 = vector.broadcast %cst_71 : f32 to vector<1x1x16xf32>
    %277 = arith.subf %275, %276 : vector<1x1x16xf32>
    %cst_72 = arith.constant 1.000000e+30 : f32
    %278 = vector.broadcast %cst_72 : f32 to vector<1x1x16xf32>
    %279 = arith.mulf %277, %278 : vector<1x1x16xf32>
    %280 = tpu.iota {dimensions = array<i32: 2>} : vector<1x1x32xi32>
    %cst_73 = arith.constant 0.000000e+00 : f32
    %281 = vector.broadcast %cst_73 : f32 to vector<1x16x32xf32>
    %c0_i32_74 = arith.constant 0 : i32
    %282 = vector.broadcast %c0_i32_74 : i32 to vector<1x1x32xi32>
    %283 = arith.cmpi sge, %280, %282 : vector<1x1x32xi32>
    %c8_i32 = arith.constant 8 : i32
    %284 = vector.broadcast %c8_i32 : i32 to vector<1x1x32xi32>
    %285 = arith.cmpi slt, %280, %284 : vector<1x1x32xi32>
    %286 = arith.andi %283, %285 : vector<1x1x32xi1>
    %287 = arith.extui %286 : vector<1x1x32xi1> to vector<1x1x32xi32>
    %288 = arith.sitofp %287 : vector<1x1x32xi32> to vector<1x1x32xf32>
    %289 = arith.truncf %288 : vector<1x1x32xf32> to vector<1x1x32xbf16>
    %290 = vector.broadcast %289 : vector<1x1x32xbf16> to vector<1x16x32xbf16>
    %291 = arith.mulf %268, %290 : vector<1x16x32xbf16>
    %cst_75 = arith.constant dense<0.000000e+00> : vector<1x16x16xf32>
    %292 = tpu.matmul %291, %271, %cst_75 {dimension_numbers = #tpu.dot_dimension_numbers<[2], [2], [1], [1], [0, 0, 0, 1, 1, 1], [0], [0]>} : vector<1x16x32xbf16>, vector<1x16x32xbf16>, vector<1x16x16xf32> -> vector<1x16x16xf32>
    %293 = vector.broadcast %279 : vector<1x1x16xf32> to vector<1x16x16xf32>
    %294 = arith.addf %292, %293 : vector<1x16x16xf32>
    %cst_76 = arith.constant dense<0xFF800000> : vector<1x16xf32>
    %295 = vector.multi_reduction <maximumf>, %294, %cst_76 [2] : vector<1x16x16xf32> to vector<1x16xf32>
    %296 = vector.shape_cast %295 : vector<1x16xf32> to vector<1x16x1xf32>
    %297 = vector.broadcast %296 : vector<1x16x1xf32> to vector<1x16x16xf32>
    %298 = arith.subf %294, %297 : vector<1x16x16xf32>
    %299 = math.exp %298 : vector<1x16x16xf32>
    %cst_77 = arith.constant dense<0.000000e+00> : vector<1x16xf32>
    %300 = vector.multi_reduction <add>, %299, %cst_77 [2] : vector<1x16x16xf32> to vector<1x16xf32>
    %301 = vector.shape_cast %300 : vector<1x16xf32> to vector<1x16x1xf32>
    %302 = tpu.reciprocal %301 {approx = true} : vector<1x16x1xf32> -> vector<1x16x1xf32>
    %303 = vector.broadcast %302 : vector<1x16x1xf32> to vector<1x16x16xf32>
    %304 = arith.mulf %299, %303 : vector<1x16x16xf32>
    %305 = arith.truncf %304 : vector<1x16x16xf32> to vector<1x16x16xbf16>
    %306 = vector.broadcast %289 : vector<1x1x32xbf16> to vector<1x16x32xbf16>
    %307 = arith.mulf %274, %306 : vector<1x16x32xbf16>
    %cst_78 = arith.constant dense<0.000000e+00> : vector<1x16x32xf32>
    %308 = tpu.matmul %305, %307, %cst_78 {dimension_numbers = #tpu.dot_dimension_numbers<[2], [1], [1], [2], [0, 0, 0, 1, 1, 2], [0], [0]>} : vector<1x16x16xbf16>, vector<1x16x32xbf16>, vector<1x16x32xf32> -> vector<1x16x32xf32>
    %309 = arith.addf %281, %308 : vector<1x16x32xf32>
    %c8_i32_79 = arith.constant 8 : i32
    %310 = vector.broadcast %c8_i32_79 : i32 to vector<1x1x32xi32>
    %311 = arith.cmpi sge, %280, %310 : vector<1x1x32xi32>
    %c16_i32_80 = arith.constant 16 : i32
    %312 = vector.broadcast %c16_i32_80 : i32 to vector<1x1x32xi32>
    %313 = arith.cmpi slt, %280, %312 : vector<1x1x32xi32>
    %314 = arith.andi %311, %313 : vector<1x1x32xi1>
    %315 = arith.extui %314 : vector<1x1x32xi1> to vector<1x1x32xi32>
    %316 = arith.sitofp %315 : vector<1x1x32xi32> to vector<1x1x32xf32>
    %317 = arith.truncf %316 : vector<1x1x32xf32> to vector<1x1x32xbf16>
    %318 = vector.broadcast %317 : vector<1x1x32xbf16> to vector<1x16x32xbf16>
    %319 = arith.mulf %268, %318 : vector<1x16x32xbf16>
    %cst_81 = arith.constant dense<0.000000e+00> : vector<1x16x16xf32>
    %320 = tpu.matmul %319, %271, %cst_81 {dimension_numbers = #tpu.dot_dimension_numbers<[2], [2], [1], [1], [0, 0, 0, 1, 1, 1], [0], [0]>} : vector<1x16x32xbf16>, vector<1x16x32xbf16>, vector<1x16x16xf32> -> vector<1x16x16xf32>
    %321 = vector.broadcast %279 : vector<1x1x16xf32> to vector<1x16x16xf32>
    %322 = arith.addf %320, %321 : vector<1x16x16xf32>
    %cst_82 = arith.constant dense<0xFF800000> : vector<1x16xf32>
    %323 = vector.multi_reduction <maximumf>, %322, %cst_82 [2] : vector<1x16x16xf32> to vector<1x16xf32>
    %324 = vector.shape_cast %323 : vector<1x16xf32> to vector<1x16x1xf32>
    %325 = vector.broadcast %324 : vector<1x16x1xf32> to vector<1x16x16xf32>
    %326 = arith.subf %322, %325 : vector<1x16x16xf32>
    %327 = math.exp %326 : vector<1x16x16xf32>
    %cst_83 = arith.constant dense<0.000000e+00> : vector<1x16xf32>
    %328 = vector.multi_reduction <add>, %327, %cst_83 [2] : vector<1x16x16xf32> to vector<1x16xf32>
    %329 = vector.shape_cast %328 : vector<1x16xf32> to vector<1x16x1xf32>
    %330 = tpu.reciprocal %329 {approx = true} : vector<1x16x1xf32> -> vector<1x16x1xf32>
    %331 = vector.broadcast %330 : vector<1x16x1xf32> to vector<1x16x16xf32>
    %332 = arith.mulf %327, %331 : vector<1x16x16xf32>
    %333 = arith.truncf %332 : vector<1x16x16xf32> to vector<1x16x16xbf16>
    %334 = vector.broadcast %317 : vector<1x1x32xbf16> to vector<1x16x32xbf16>
    %335 = arith.mulf %274, %334 : vector<1x16x32xbf16>
    %cst_84 = arith.constant dense<0.000000e+00> : vector<1x16x32xf32>
    %336 = tpu.matmul %333, %335, %cst_84 {dimension_numbers = #tpu.dot_dimension_numbers<[2], [1], [1], [2], [0, 0, 0, 1, 1, 2], [0], [0]>} : vector<1x16x16xbf16>, vector<1x16x32xbf16>, vector<1x16x32xf32> -> vector<1x16x32xf32>
    %337 = arith.addf %309, %336 : vector<1x16x32xf32>
    %c16_i32_85 = arith.constant 16 : i32
    %338 = vector.broadcast %c16_i32_85 : i32 to vector<1x1x32xi32>
    %339 = arith.cmpi sge, %280, %338 : vector<1x1x32xi32>
    %c24_i32 = arith.constant 24 : i32
    %340 = vector.broadcast %c24_i32 : i32 to vector<1x1x32xi32>
    %341 = arith.cmpi slt, %280, %340 : vector<1x1x32xi32>
    %342 = arith.andi %339, %341 : vector<1x1x32xi1>
    %343 = arith.extui %342 : vector<1x1x32xi1> to vector<1x1x32xi32>
    %344 = arith.sitofp %343 : vector<1x1x32xi32> to vector<1x1x32xf32>
    %345 = arith.truncf %344 : vector<1x1x32xf32> to vector<1x1x32xbf16>
    %346 = vector.broadcast %345 : vector<1x1x32xbf16> to vector<1x16x32xbf16>
    %347 = arith.mulf %268, %346 : vector<1x16x32xbf16>
    %cst_86 = arith.constant dense<0.000000e+00> : vector<1x16x16xf32>
    %348 = tpu.matmul %347, %271, %cst_86 {dimension_numbers = #tpu.dot_dimension_numbers<[2], [2], [1], [1], [0, 0, 0, 1, 1, 1], [0], [0]>} : vector<1x16x32xbf16>, vector<1x16x32xbf16>, vector<1x16x16xf32> -> vector<1x16x16xf32>
    %349 = vector.broadcast %279 : vector<1x1x16xf32> to vector<1x16x16xf32>
    %350 = arith.addf %348, %349 : vector<1x16x16xf32>
    %cst_87 = arith.constant dense<0xFF800000> : vector<1x16xf32>
    %351 = vector.multi_reduction <maximumf>, %350, %cst_87 [2] : vector<1x16x16xf32> to vector<1x16xf32>
    %352 = vector.shape_cast %351 : vector<1x16xf32> to vector<1x16x1xf32>
    %353 = vector.broadcast %352 : vector<1x16x1xf32> to vector<1x16x16xf32>
    %354 = arith.subf %350, %353 : vector<1x16x16xf32>
    %355 = math.exp %354 : vector<1x16x16xf32>
    %cst_88 = arith.constant dense<0.000000e+00> : vector<1x16xf32>
    %356 = vector.multi_reduction <add>, %355, %cst_88 [2] : vector<1x16x16xf32> to vector<1x16xf32>
    %357 = vector.shape_cast %356 : vector<1x16xf32> to vector<1x16x1xf32>
    %358 = tpu.reciprocal %357 {approx = true} : vector<1x16x1xf32> -> vector<1x16x1xf32>
    %359 = vector.broadcast %358 : vector<1x16x1xf32> to vector<1x16x16xf32>
    %360 = arith.mulf %355, %359 : vector<1x16x16xf32>
    %361 = arith.truncf %360 : vector<1x16x16xf32> to vector<1x16x16xbf16>
    %362 = vector.broadcast %345 : vector<1x1x32xbf16> to vector<1x16x32xbf16>
    %363 = arith.mulf %274, %362 : vector<1x16x32xbf16>
    %cst_89 = arith.constant dense<0.000000e+00> : vector<1x16x32xf32>
    %364 = tpu.matmul %361, %363, %cst_89 {dimension_numbers = #tpu.dot_dimension_numbers<[2], [1], [1], [2], [0, 0, 0, 1, 1, 2], [0], [0]>} : vector<1x16x16xbf16>, vector<1x16x32xbf16>, vector<1x16x32xf32> -> vector<1x16x32xf32>
    %365 = arith.addf %337, %364 : vector<1x16x32xf32>
    %c24_i32_90 = arith.constant 24 : i32
    %366 = vector.broadcast %c24_i32_90 : i32 to vector<1x1x32xi32>
    %367 = arith.cmpi sge, %280, %366 : vector<1x1x32xi32>
    %c32_i32 = arith.constant 32 : i32
    %368 = vector.broadcast %c32_i32 : i32 to vector<1x1x32xi32>
    %369 = arith.cmpi slt, %280, %368 : vector<1x1x32xi32>
    %370 = arith.andi %367, %369 : vector<1x1x32xi1>
    %371 = arith.extui %370 : vector<1x1x32xi1> to vector<1x1x32xi32>
    %372 = arith.sitofp %371 : vector<1x1x32xi32> to vector<1x1x32xf32>
    %373 = arith.truncf %372 : vector<1x1x32xf32> to vector<1x1x32xbf16>
    %374 = vector.broadcast %373 : vector<1x1x32xbf16> to vector<1x16x32xbf16>
    %375 = arith.mulf %268, %374 : vector<1x16x32xbf16>
    %cst_91 = arith.constant dense<0.000000e+00> : vector<1x16x16xf32>
    %376 = tpu.matmul %375, %271, %cst_91 {dimension_numbers = #tpu.dot_dimension_numbers<[2], [2], [1], [1], [0, 0, 0, 1, 1, 1], [0], [0]>} : vector<1x16x32xbf16>, vector<1x16x32xbf16>, vector<1x16x16xf32> -> vector<1x16x16xf32>
    %377 = vector.broadcast %279 : vector<1x1x16xf32> to vector<1x16x16xf32>
    %378 = arith.addf %376, %377 : vector<1x16x16xf32>
    %cst_92 = arith.constant dense<0xFF800000> : vector<1x16xf32>
    %379 = vector.multi_reduction <maximumf>, %378, %cst_92 [2] : vector<1x16x16xf32> to vector<1x16xf32>
    %380 = vector.shape_cast %379 : vector<1x16xf32> to vector<1x16x1xf32>
    %381 = vector.broadcast %380 : vector<1x16x1xf32> to vector<1x16x16xf32>
    %382 = arith.subf %378, %381 : vector<1x16x16xf32>
    %383 = math.exp %382 : vector<1x16x16xf32>
    %cst_93 = arith.constant dense<0.000000e+00> : vector<1x16xf32>
    %384 = vector.multi_reduction <add>, %383, %cst_93 [2] : vector<1x16x16xf32> to vector<1x16xf32>
    %385 = vector.shape_cast %384 : vector<1x16xf32> to vector<1x16x1xf32>
    %386 = tpu.reciprocal %385 {approx = true} : vector<1x16x1xf32> -> vector<1x16x1xf32>
    %387 = vector.broadcast %386 : vector<1x16x1xf32> to vector<1x16x16xf32>
    %388 = arith.mulf %383, %387 : vector<1x16x16xf32>
    %389 = arith.truncf %388 : vector<1x16x16xf32> to vector<1x16x16xbf16>
    %390 = vector.broadcast %373 : vector<1x1x32xbf16> to vector<1x16x32xbf16>
    %391 = arith.mulf %274, %390 : vector<1x16x32xbf16>
    %cst_94 = arith.constant dense<0.000000e+00> : vector<1x16x32xf32>
    %392 = tpu.matmul %389, %391, %cst_94 {dimension_numbers = #tpu.dot_dimension_numbers<[2], [1], [1], [2], [0, 0, 0, 1, 1, 2], [0], [0]>} : vector<1x16x16xbf16>, vector<1x16x32xbf16>, vector<1x16x32xf32> -> vector<1x16x32xf32>
    %393 = arith.addf %365, %392 : vector<1x16x32xf32>
    %394 = vector.shape_cast %393 : vector<1x16x32xf32> to vector<16x32xf32>
    %395 = arith.addf %394, %234 : vector<16x32xf32>
    %c8 = arith.constant 8 : index
    %c0_95 = arith.constant 0 : index
    %396 = vector.load %arg8[%c8, %c0_95] : memref<12x32xf32, #tpu.memory_space<vmem>>, vector<1x32xf32>
    %397 = vector.shape_cast %396 : vector<1x32xf32> to vector<32xf32>
    %398 = vector.shape_cast %397 : vector<32xf32> to vector<1x32xf32>
    %c9 = arith.constant 9 : index
    %c0_96 = arith.constant 0 : index
    %399 = vector.load %arg8[%c9, %c0_96] : memref<12x32xf32, #tpu.memory_space<vmem>>, vector<1x32xf32>
    %400 = vector.shape_cast %399 : vector<1x32xf32> to vector<32xf32>
    %401 = vector.shape_cast %400 : vector<32xf32> to vector<1x32xf32>
    %cst_97 = arith.constant dense<0.000000e+00> : vector<16xf32>
    %402 = vector.multi_reduction <add>, %395, %cst_97 [1] : vector<16x32xf32> to vector<16xf32>
    %403 = vector.shape_cast %402 : vector<16xf32> to vector<16x1xf32>
    %cst_98 = arith.constant 3.200000e+01 : f32
    %404 = vector.broadcast %cst_98 : f32 to vector<16x1xf32>
    %405 = arith.divf %403, %404 : vector<16x1xf32>
    %406 = arith.mulf %395, %395 : vector<16x32xf32>
    %cst_99 = arith.constant dense<0.000000e+00> : vector<16xf32>
    %407 = vector.multi_reduction <add>, %406, %cst_99 [1] : vector<16x32xf32> to vector<16xf32>
    %408 = vector.shape_cast %407 : vector<16xf32> to vector<16x1xf32>
    %cst_100 = arith.constant 3.200000e+01 : f32
    %409 = vector.broadcast %cst_100 : f32 to vector<16x1xf32>
    %410 = arith.divf %408, %409 : vector<16x1xf32>
    %411 = arith.mulf %405, %405 : vector<16x1xf32>
    %412 = arith.subf %410, %411 : vector<16x1xf32>
    %413 = vector.broadcast %405 : vector<16x1xf32> to vector<16x32xf32>
    %414 = arith.subf %395, %413 : vector<16x32xf32>
    %cst_101 = arith.constant 9.99999974E-6 : f32
    %415 = vector.broadcast %cst_101 : f32 to vector<16x1xf32>
    %416 = arith.addf %412, %415 : vector<16x1xf32>
    %417 = math.rsqrt %416 : vector<16x1xf32>
    %418 = vector.broadcast %417 : vector<16x1xf32> to vector<16x32xf32>
    %419 = arith.mulf %414, %418 : vector<16x32xf32>
    %420 = vector.broadcast %398 : vector<1x32xf32> to vector<16x32xf32>
    %421 = arith.mulf %419, %420 : vector<16x32xf32>
    %422 = vector.broadcast %401 : vector<1x32xf32> to vector<16x32xf32>
    %423 = arith.addf %421, %422 : vector<16x32xf32>
    %c0_102 = arith.constant 0 : index
    %c0_103 = arith.constant 0 : index
    %c0_104 = arith.constant 0 : index
    %424 = vector.load %arg7[%c0_102, %c0_103, %c0_104] : memref<2x32x32xbf16, #tpu.memory_space<vmem>>, vector<1x32x32xbf16>
    %425 = vector.shape_cast %424 : vector<1x32x32xbf16> to vector<32x32xbf16>
    %426 = arith.truncf %423 : vector<16x32xf32> to vector<16x32xbf16>
    %cst_105 = arith.constant dense<0.000000e+00> : vector<16x32xf32>
    %427 = tpu.matmul %426, %425, %cst_105 {dimension_numbers = #tpu.dot_dimension_numbers<[1], [0], [0], [1], [0, 0, 1, 1], [], []>} : vector<16x32xbf16>, vector<32x32xbf16>, vector<16x32xf32> -> vector<16x32xf32>
    %c10 = arith.constant 10 : index
    %c0_106 = arith.constant 0 : index
    %428 = vector.load %arg8[%c10, %c0_106] : memref<12x32xf32, #tpu.memory_space<vmem>>, vector<1x32xf32>
    %429 = vector.shape_cast %428 : vector<1x32xf32> to vector<32xf32>
    %430 = vector.shape_cast %429 : vector<32xf32> to vector<1x32xf32>
    %431 = vector.broadcast %430 : vector<1x32xf32> to vector<16x32xf32>
    %432 = arith.addf %427, %431 : vector<16x32xf32>
    %cst_107 = arith.constant 0.000000e+00 : f32
    %433 = vector.broadcast %cst_107 : f32 to vector<16x32xf32>
    %434 = arith.maximumf %432, %433 : vector<16x32xf32>
    %c1_108 = arith.constant 1 : index
    %c0_109 = arith.constant 0 : index
    %c0_110 = arith.constant 0 : index
    %435 = vector.load %arg7[%c1_108, %c0_109, %c0_110] : memref<2x32x32xbf16, #tpu.memory_space<vmem>>, vector<1x32x32xbf16>
    %436 = vector.shape_cast %435 : vector<1x32x32xbf16> to vector<32x32xbf16>
    %437 = arith.truncf %434 : vector<16x32xf32> to vector<16x32xbf16>
    %cst_111 = arith.constant dense<0.000000e+00> : vector<16x32xf32>
    %438 = tpu.matmul %437, %436, %cst_111 {dimension_numbers = #tpu.dot_dimension_numbers<[1], [0], [0], [1], [0, 0, 1, 1], [], []>} : vector<16x32xbf16>, vector<32x32xbf16>, vector<16x32xf32> -> vector<16x32xf32>
    %c11 = arith.constant 11 : index
    %c0_112 = arith.constant 0 : index
    %439 = vector.load %arg8[%c11, %c0_112] : memref<12x32xf32, #tpu.memory_space<vmem>>, vector<1x32xf32>
    %440 = vector.shape_cast %439 : vector<1x32xf32> to vector<32xf32>
    %441 = vector.shape_cast %440 : vector<32xf32> to vector<1x32xf32>
    %442 = vector.broadcast %441 : vector<1x32xf32> to vector<16x32xf32>
    %443 = arith.addf %438, %442 : vector<16x32xf32>
    %444 = arith.addf %443, %395 : vector<16x32xf32>
    %445 = vector.shape_cast %444 : vector<16x32xf32> to vector<1x16x32xf32>
    %446 = vector.shape_cast %445 : vector<1x16x32xf32> to vector<16x32xf32>
    %447 = tpu.transpose %446, [1, 0] : vector<16x32xf32> -> vector<32x16xf32>
    %448 = vector.shape_cast %447 : vector<32x16xf32> to vector<1x32x16xf32>
    %c0_113 = arith.constant 0 : index
    %c0_114 = arith.constant 0 : index
    %c0_115 = arith.constant 0 : index
    %449 = vector.load %arg9[%c0_113, %c0_114, %c0_115] : memref<1x32x16xf32, #tpu.memory_space<vmem>>, vector<1x32x16xf32>
    tpu.vector_store %arg9[%c0_113, %c0_114, %c0_115], %448 {strides = array<i32>} : memref<1x32x16xf32, #tpu.memory_space<vmem>>, vector<1x32x16xf32>,
    return
  }
  func.func @transform_0(%arg0: i32) -> (i32, i32) {
    %c0_i32 = arith.constant 0 : i32
    %c0_i32_0 = arith.constant 0 : i32
    %c0_i32_1 = arith.constant 0 : i32
    return %c0_i32, %c0_i32_0 : i32, i32
  }
  func.func @transform_1(%arg0: i32) -> (i32, i32, i32) {
    %c0_i32 = arith.constant 0 : i32
    %c0_i32_0 = arith.constant 0 : i32
    %c0_i32_1 = arith.constant 0 : i32
    return %arg0, %c0_i32, %c0_i32_0 : i32, i32, i32
  }
  func.func @transform_2(%arg0: i32) -> (i32, i32, i32) {
    %c0_i32 = arith.constant 0 : i32
    %c0_i32_0 = arith.constant 0 : i32
    %c0_i32_1 = arith.constant 0 : i32
    return %arg0, %c0_i32, %c0_i32_0 : i32, i32, i32
  }
  func.func @transform_3(%arg0: i32) -> (i32, i32, i32) {
    %c0_i32 = arith.constant 0 : i32
    %c0_i32_0 = arith.constant 0 : i32
    %c0_i32_1 = arith.constant 0 : i32
    %c0_i32_2 = arith.constant 0 : i32
    return %c0_i32, %c0_i32_0, %c0_i32_1 : i32, i32, i32
  }
  func.func @transform_4(%arg0: i32) -> (i32, i32, i32) {
    %c0_i32 = arith.constant 0 : i32
    %c0_i32_0 = arith.constant 0 : i32
    %c0_i32_1 = arith.constant 0 : i32
    %c0_i32_2 = arith.constant 0 : i32
    return %c0_i32, %c0_i32_0, %c0_i32_1 : i32, i32, i32
  }
  func.func @transform_5(%arg0: i32) -> (i32, i32) {
    %c0_i32 = arith.constant 0 : i32
    %c0_i32_0 = arith.constant 0 : i32
    %c0_i32_1 = arith.constant 0 : i32
    return %c0_i32, %c0_i32_0 : i32, i32
  }
  func.func @transform_6(%arg0: i32) -> (i32, i32, i32) {
    %c0_i32 = arith.constant 0 : i32
    %c0_i32_0 = arith.constant 0 : i32
    %c0_i32_1 = arith.constant 0 : i32
    %c0_i32_2 = arith.constant 0 : i32
    return %c0_i32, %c0_i32_0, %c0_i32_1 : i32, i32, i32
  }
  func.func @transform_7(%arg0: i32) -> (i32, i32) {
    %c0_i32 = arith.constant 0 : i32
    %c0_i32_0 = arith.constant 0 : i32
    %c0_i32_1 = arith.constant 0 : i32
    return %c0_i32, %c0_i32_0 : i32, i32
  }
  func.func @transform_8(%arg0: i32) -> (i32, i32, i32) {
    %c0_i32 = arith.constant 0 : i32
    %c0_i32_0 = arith.constant 0 : i32
    %c0_i32_1 = arith.constant 0 : i32
    return %arg0, %c0_i32, %c0_i32_0 : i32, i32, i32
  }
}

</mosaic_0001>

<llo_original>
// kernel: tpu_custom_call.1
$region0: #{tpu_custom_call.1}
  #allocation0 [shape = 'u32[]', space=smem, size = 0x4, offset = 0x4, fixed_abs, tag = 'smem constant byte address 0x4 - core index']
  #allocation1 [shape = 'u32[72,128]{1,0:T(1,128)}', space=vmem, size = 0x9000, scoped, tag = 'internal scratch']
  %s0 = inlined_call_operand.vmem [shape: f32[16,32], index: 0, kind: input, shape index: {}]
  %s1 = inlined_call_operand.vmem [shape: f32[2,1,16], index: 1, kind: input, shape index: {}]
  %s2 = inlined_call_operand.vmem [shape: f32[2,32,16], index: 2, kind: input, shape index: {}]
  %s3 = inlined_call_operand.vmem [shape: f32[2,5,32], index: 3, kind: input, shape index: {}]
  %s4 = inlined_call_operand.vmem [shape: bf16[2,32,32], index: 4, kind: input, shape index: {}]
  %s5 = inlined_call_operand.vmem [shape: bf16[32,96], index: 5, kind: input, shape index: {}]
  %s6 = inlined_call_operand.vmem [shape: bf16[2,32,32], index: 6, kind: input, shape index: {}]
  %s7 = inlined_call_operand.vmem [shape: f32[12,32], index: 7, kind: input, shape index: {}]
  %s8 = inlined_call_operand.vmem [shape: f32[2,32,16], index: 8, kind: output, shape index: {}]
  %s9 = sld [smem:[#allocation0]]
  $region65: #{tpu_custom_call.1} parent=0
    _
  %s11 = ssub.s32 1, %s9
  %s12 = scalar_select 0, %s11, %s9
  loop: start=0, step=1, limit=4
  $region2: #{tpu_custom_call.1} parent=0 // loop_pre_header
    _
  $region3: #{tpu_custom_call.1} parent=0 // loop_header
    %s14 = sphi 0, %s18
    %p15 = scmp.ge.s32.totalorder %s14, 4
    %s22 = sphi 0, %s22
    %s24 = sphi 0, %s22
    %s25 = sphi 0, %s24
    %s39 = sphi 0, %s25
    %s45 = sphi 0, %s47
    %s48 = sphi 0, %s45
    %s49 = sphi 0, %s48
    %s65 = sphi 0, %s49
    %s71 = sphi 0, %s73
    %s74 = sphi 0, %s71
    %s75 = sphi 0, %s74
    %s91 = sphi 0, %s75
    %s95 = sphi 0, %s95
    %s97 = sphi 0, %s95
    %s98 = sphi 0, %s97
    %s112 = sphi 0, %s98
    %s116 = sphi 0, %s116
    %s118 = sphi 0, %s116
    %s119 = sphi 0, %s118
    %s133 = sphi 0, %s119
    %s137 = sphi 0, %s137
    %s139 = sphi 0, %s137
    %s140 = sphi 0, %s139
    %s154 = sphi 0, %s140
    %s158 = sphi 0, %s158
    %s160 = sphi 0, %s158
    %s161 = sphi 0, %s160
    %s175 = sphi 0, %s161
    %s179 = sphi 0, %s179
    %s181 = sphi 0, %s179
    %s182 = sphi 0, %s181
    %s196 = sphi 0, %s182
    %s202 = sphi 0, %s204
    %s205 = sphi 0, %s202
    %s206 = sphi 0, %s205
    %s222 = sphi 0, %s206
  $region4: #{tpu_custom_call.1} parent=0 // loop_header_branch
    %17 = sbr.rel (%p15) target = $region8
  $region5: #{tpu_custom_call.1} parent=0 // loop_body
    %s19 = ssub.s32 %s14, 1
    %s20 = ssub.s32 %s14, 2
    %s21 = sadd.s32 %s14, 1
    %s23 = sadd.s32 %s22, 1
    %p26 = scmp.eq.s32.totalorder %s14, 1
    %p27 = scmp.ne.s32.totalorder %s22, %s24
    %p28 = scmp.eq.s32.totalorder %s14, 0
    %p29 = por %p27, %p28
    %p30 = scmp.ne.s32.totalorder %s22, %s24
    %p31 = scmp.eq.s32.totalorder %s19, 1
    %p32 = por %p30, %p31
    %p33 = scmp.ne.s32.totalorder %s24, %s25
    %p34 = scmp.eq.s32.totalorder %s19, 0
    %p35 = por %p33, %p34
    %p36 = scmp.ne.s32.totalorder %s24, %s25
    %p37 = scmp.eq.s32.totalorder %s20, 1
    %p38 = por %p36, %p37
    %p40 = scmp.ne.s32.totalorder %s25, %s39
    %p41 = scmp.eq.s32.totalorder %s20, 0
    %p42 = por %p40, %p41
    %s43 = ssub.s32 %s14, %s21
    %p44 = scmp.eq.s32.totalorder %s43, 0
    %s46 = sadd.s32 %s45, 1
    %s47 = scalar_select %p44, %s45, %s46
    %p50 = pneg %p44
    %p51 = scmp.eq.s32.totalorder %s14, 1
    %p52 = por %p50, %p51
    %p53 = scmp.ne.s32.totalorder %s45, %s48
    %p54 = scmp.eq.s32.totalorder %s14, 0
    %p55 = por %p53, %p54
    %p56 = scmp.ne.s32.totalorder %s45, %s48
    %p57 = scmp.eq.s32.totalorder %s19, 1
    %p58 = por %p56, %p57
    %p59 = scmp.ne.s32.totalorder %s48, %s49
    %p60 = scmp.eq.s32.totalorder %s19, 0
    %p61 = por %p59, %p60
    %p62 = scmp.ne.s32.totalorder %s48, %s49
    %p63 = scmp.eq.s32.totalorder %s20, 1
    %p64 = por %p62, %p63
    %p66 = scmp.ne.s32.totalorder %s49, %s65
    %p67 = scmp.eq.s32.totalorder %s20, 0
    %p68 = por %p66, %p67
    %s69 = ssub.s32 %s14, %s21
    %p70 = scmp.eq.s32.totalorder %s69, 0
    %s72 = sadd.s32 %s71, 1
    %s73 = scalar_select %p70, %s71, %s72
    %p76 = pneg %p70
    %p77 = scmp.eq.s32.totalorder %s14, 1
    %p78 = por %p76, %p77
    %p79 = scmp.ne.s32.totalorder %s71, %s74
    %p80 = scmp.eq.s32.totalorder %s14, 0
    %p81 = por %p79, %p80
    %p82 = scmp.ne.s32.totalorder %s71, %s74
    %p83 = scmp.eq.s32.totalorder %s19, 1
    %p84 = por %p82, %p83
    %p85 = scmp.ne.s32.totalorder %s74, %s75
    %p86 = scmp.eq.s32.totalorder %s19, 0
    %p87 = por %p85, %p86
    %p88 = scmp.ne.s32.totalorder %s74, %s75
    %p89 = scmp.eq.s32.totalorder %s20, 1
    %p90 = por %p88, %p89
    %p92 = scmp.ne.s32.totalorder %s75, %s91
    %p93 = scmp.eq.s32.totalorder %s20, 0
    %p94 = por %p92, %p93
    %s96 = sadd.s32 %s95, 1
    %p99 = scmp.eq.s32.totalorder %s14, 1
    %p100 = scmp.ne.s32.totalorder %s95, %s97
    %p101 = scmp.eq.s32.totalorder %s14, 0
    %p102 = por %p100, %p101
    %p103 = scmp.ne.s32.totalorder %s95, %s97
    %p104 = scmp.eq.s32.totalorder %s19, 1
    %p105 = por %p103, %p104
    %p106 = scmp.ne.s32.totalorder %s97, %s98
    %p107 = scmp.eq.s32.totalorder %s19, 0
    %p108 = por %p106, %p107
    %p109 = scmp.ne.s32.totalorder %s97, %s98
    %p110 = scmp.eq.s32.totalorder %s20, 1
    %p111 = por %p109, %p110
    %p113 = scmp.ne.s32.totalorder %s98, %s112
    %p114 = scmp.eq.s32.totalorder %s20, 0
    %p115 = por %p113, %p114
    %s117 = sadd.s32 %s116, 1
    %p120 = scmp.eq.s32.totalorder %s14, 1
    %p121 = scmp.ne.s32.totalorder %s116, %s118
    %p122 = scmp.eq.s32.totalorder %s14, 0
    %p123 = por %p121, %p122
    %p124 = scmp.ne.s32.totalorder %s116, %s118
    %p125 = scmp.eq.s32.totalorder %s19, 1
    %p126 = por %p124, %p125
    %p127 = scmp.ne.s32.totalorder %s118, %s119
    %p128 = scmp.eq.s32.totalorder %s19, 0
    %p129 = por %p127, %p128
    %p130 = scmp.ne.s32.totalorder %s118, %s119
    %p131 = scmp.eq.s32.totalorder %s20, 1
    %p132 = por %p130, %p131
    %p134 = scmp.ne.s32.totalorder %s119, %s133
    %p135 = scmp.eq.s32.totalorder %s20, 0
    %p136 = por %p134, %p135
    %s138 = sadd.s32 %s137, 1
    %p141 = scmp.eq.s32.totalorder %s14, 1
    %p142 = scmp.ne.s32.totalorder %s137, %s139
    %p143 = scmp.eq.s32.totalorder %s14, 0
    %p144 = por %p142, %p143
    %p145 = scmp.ne.s32.totalorder %s137, %s139
    %p146 = scmp.eq.s32.totalorder %s19, 1
    %p147 = por %p145, %p146
    %p148 = scmp.ne.s32.totalorder %s139, %s140
    %p149 = scmp.eq.s32.totalorder %s19, 0
    %p150 = por %p148, %p149
    %p151 = scmp.ne.s32.totalorder %s139, %s140
    %p152 = scmp.eq.s32.totalorder %s20, 1
    %p153 = por %p151, %p152
    %p155 = scmp.ne.s32.totalorder %s140, %s154
    %p156 = scmp.eq.s32.totalorder %s20, 0
    %p157 = por %p155, %p156
    %s159 = sadd.s32 %s158, 1
    %p162 = scmp.eq.s32.totalorder %s14, 1
    %p163 = scmp.ne.s32.totalorder %s158, %s160
    %p164 = scmp.eq.s32.totalorder %s14, 0
    %p165 = por %p163, %p164
    %p166 = scmp.ne.s32.totalorder %s158, %s160
    %p167 = scmp.eq.s32.totalorder %s19, 1
    %p168 = por %p166, %p167
    %p169 = scmp.ne.s32.totalorder %s160, %s161
    %p170 = scmp.eq.s32.totalorder %s19, 0
    %p171 = por %p169, %p170
    %p172 = scmp.ne.s32.totalorder %s160, %s161
    %p173 = scmp.eq.s32.totalorder %s20, 1
    %p174 = por %p172, %p173
    %p176 = scmp.ne.s32.totalorder %s161, %s175
    %p177 = scmp.eq.s32.totalorder %s20, 0
    %p178 = por %p176, %p177
    %s180 = sadd.s32 %s179, 1
    %p183 = scmp.eq.s32.totalorder %s14, 1
    %p184 = scmp.ne.s32.totalorder %s179, %s181
    %p185 = scmp.eq.s32.totalorder %s14, 0
    %p186 = por %p184, %p185
    %p187 = scmp.ne.s32.totalorder %s179, %s181
    %p188 = scmp.eq.s32.totalorder %s19, 1
    %p189 = por %p187, %p188
    %p190 = scmp.ne.s32.totalorder %s181, %s182
    %p191 = scmp.eq.s32.totalorder %s19, 0
    %p192 = por %p190, %p191
    %p193 = scmp.ne.s32.totalorder %s181, %s182
    %p194 = scmp.eq.s32.totalorder %s20, 1
    %p195 = por %p193, %p194
    %p197 = scmp.ne.s32.totalorder %s182, %s196
    %p198 = scmp.eq.s32.totalorder %s20, 0
    %p199 = por %p197, %p198
    %s200 = ssub.s32 %s14, %s21
    %p201 = scmp.eq.s32.totalorder %s200, 0
    %s203 = sadd.s32 %s202, 1
    %s204 = scalar_select %p201, %s202, %s203
    %p207 = pneg %p201
    %p208 = scmp.eq.s32.totalorder %s14, 1
    %p209 = por %p207, %p208
    %p210 = scmp.ne.s32.totalorder %s202, %s205
    %p211 = scmp.eq.s32.totalorder %s14, 0
    %p212 = por %p210, %p211
    %p213 = scmp.ne.s32.totalorder %s202, %s205
    %p214 = scmp.eq.s32.totalorder %s19, 1
    %p215 = por %p213, %p214
    %p216 = scmp.ne.s32.totalorder %s205, %s206
    %p217 = scmp.eq.s32.totalorder %s19, 0
    %p218 = por %p216, %p217
    %p219 = scmp.ne.s32.totalorder %s205, %s206
    %p220 = scmp.eq.s32.totalorder %s20, 1
    %p221 = por %p219, %p220
    %p223 = scmp.ne.s32.totalorder %s206, %s222
    %p224 = scmp.eq.s32.totalorder %s20, 0
    %p225 = por %p223, %p224
    %p226 = scmp.le.s32.totalorder 1, %s14
    %p227 = scmp.lt.s32.totalorder %s14, 3
    %p228 = pnand %p226, %p227
    %p229 = pneg %p228
    // Predicated region
    $region9: #{tpu_custom_call.1} parent=5 // pred_check
      _
    $region10: #{tpu_custom_call.1} parent=5 // pred_check_branch
      %231 = sbr.rel (%p228) target = $region12
    $region11: #{tpu_custom_call.1} parent=5 // pred_region
      %s232 = ssub.s32 %s14, 1
      // Predicated region
      $region13: #{tpu_custom_call.1} parent=11 // pred_check
        %p233 = pneg %p35
      $region14: #{tpu_custom_call.1} parent=11 // pred_check_branch
        %235 = sbr.rel (%p233) target = $region16
      $region15: #{tpu_custom_call.1} parent=11 // pred_region
        _
      $region16: #{tpu_custom_call.1} parent=11 // pred_fallthru
        _
      // Predicated region
      $region17: #{tpu_custom_call.1} parent=11 // pred_check
        %p236 = pneg %p108
      $region18: #{tpu_custom_call.1} parent=11 // pred_check_branch
        %238 = sbr.rel (%p236) target = $region20
      $region19: #{tpu_custom_call.1} parent=11 // pred_region
        _
      $region20: #{tpu_custom_call.1} parent=11 // pred_fallthru
        _
      // Predicated region
      $region21: #{tpu_custom_call.1} parent=11 // pred_check
        %p239 = pneg %p129
      $region22: #{tpu_custom_call.1} parent=11 // pred_check_branch
        %241 = sbr.rel (%p239) target = $region24
      $region23: #{tpu_custom_call.1} parent=11 // pred_region
        _
      $region24: #{tpu_custom_call.1} parent=11 // pred_fallthru
        _
      // Predicated region
      $region25: #{tpu_custom_call.1} parent=11 // pred_check
        %p242 = pneg %p150
      $region26: #{tpu_custom_call.1} parent=11 // pred_check_branch
        %244 = sbr.rel (%p242) target = $region28
      $region27: #{tpu_custom_call.1} parent=11 // pred_region
        _
      $region28: #{tpu_custom_call.1} parent=11 // pred_fallthru
        _
      // Predicated region
      $region29: #{tpu_custom_call.1} parent=11 // pred_check
        %p245 = pneg %p171
      $region30: #{tpu_custom_call.1} parent=11 // pred_check_branch
        %247 = sbr.rel (%p245) target = $region32
      $region31: #{tpu_custom_call.1} parent=11 // pred_region
        _
      $region32: #{tpu_custom_call.1} parent=11 // pred_fallthru
        _
      // Predicated region
      $region33: #{tpu_custom_call.1} parent=11 // pred_check
        %p248 = pneg %p192
      $region34: #{tpu_custom_call.1} parent=11 // pred_check_branch
        %250 = sbr.rel (%p248) target = $region36
      $region35: #{tpu_custom_call.1} parent=11 // pred_region
        _
      $region36: #{tpu_custom_call.1} parent=11 // pred_fallthru
        _
    $region12: #{tpu_custom_call.1} parent=5 // pred_fallthru
      _
    %p251 = scmp.lt.s32.totalorder %s14, 2
    // Predicated region
    $region37: #{tpu_custom_call.1} parent=5 // pred_check
      %p252 = pneg %p251
    $region38: #{tpu_custom_call.1} parent=5 // pred_check_branch
      %254 = sbr.rel (%p252) target = $region40
    $region39: #{tpu_custom_call.1} parent=5 // pred_region
      // Predicated region
      $region41: #{tpu_custom_call.1} parent=39 // pred_check
        %p255 = pneg %p55
      $region42: #{tpu_custom_call.1} parent=39 // pred_check_branch
        %257 = sbr.rel (%p255) target = $region44
      $region43: #{tpu_custom_call.1} parent=39 // pred_region
        %p258 = scmp.lt.s32.totalorder %s14, 1
        %s259 = scalar_select %p258, %s14, 1
        %s260 = scalar_lea.vmem %s1, %s259
      $region44: #{tpu_custom_call.1} parent=39 // pred_fallthru
        _
      // Predicated region
      $region45: #{tpu_custom_call.1} parent=39 // pred_check
        %p261 = pneg %p81
      $region46: #{tpu_custom_call.1} parent=39 // pred_check_branch
        %263 = sbr.rel (%p261) target = $region48
      $region47: #{tpu_custom_call.1} parent=39 // pred_region
        %p264 = scmp.lt.s32.totalorder %s14, 1
        %s265 = scalar_select %p264, %s14, 1
        %s266 = smul.addr %s265, 4
        %s267 = smul.addr %s266, 8
        %s268 = scalar_lea.vmem %s2, %s267
      $region48: #{tpu_custom_call.1} parent=39 // pred_fallthru
        _
    $region40: #{tpu_custom_call.1} parent=5 // pred_fallthru
      _
    %p269 = scmp.le.s32.totalorder 1, %s14
    %p270 = scmp.lt.s32.totalorder %s14, 3
    %p271 = pnand %p269, %p270
    %p272 = pneg %p271
    // Predicated region
    $region49: #{tpu_custom_call.1} parent=5 // pred_check
      _
    $region50: #{tpu_custom_call.1} parent=5 // pred_check_branch
      %274 = sbr.rel (%p271) target = $region52
    $region51: #{tpu_custom_call.1} parent=5 // pred_region
      %s275 = ssub.s32 %s14, 1
      %p276 = pneg %p35
      %p277 = pneg %p32
      %p278 = scmp.lt.s32.totalorder %s19, 1
      %s279 = scalar_select %p278, %s19, 1
      %s280 = scalar_lea.vmem %s1, %s279
      %p281 = pneg %p61
      %p282 = pneg %p58
      %p283 = scmp.lt.s32.totalorder %s19, 1
      %s284 = scalar_select %p283, %s19, 1
      %s285 = smul.addr %s284, 4
      %s286 = smul.addr %s285, 8
      %s287 = scalar_lea.vmem %s2, %s286
      %p288 = pneg %p87
      %p289 = pneg %p84
      %p290 = pneg %p108
      %p291 = pneg %p105
      %p292 = pneg %p129
      %p293 = pneg %p126
      %p294 = pneg %p150
      %p295 = pneg %p147
      %p296 = pneg %p171
      %p297 = pneg %p168
      %p298 = pneg %p192
      %p299 = pneg %p189
      %p300 = pneg %p218
      %p301 = pneg %p215
      %p302 = scmp.lt.s32.totalorder %s19, 1
      %s303 = scalar_select %p302, %s19, 1
      %s304 = smul.addr %s303, 4
      %s305 = smul.addr %s304, 8
      %s306 = scalar_lea.vmem %s8, %s305
      %p307 = scmp.lt.s32.totalorder %s19, 1
      %s308 = scalar_select %p307, %s19, 1
      %s309 = scalar_lea.vmem %s1, %s308
      %p310 = scmp.lt.s32.totalorder %s19, 1
      %s311 = scalar_select %p310, %s19, 1
      %s312 = smul.addr %s311, 4
      %s313 = smul.addr %s312, 8
      %s314 = scalar_lea.vmem %s2, %s313
      %p315 = scmp.lt.s32.totalorder %s19, 1
      %s316 = scalar_select %p315, %s19, 1
      %s317 = smul.addr %s316, 4
      %s318 = smul.addr %s317, 8
      %s319 = scalar_lea.vmem %s8, %s318
      %v321 = vld [vmem:[%s314] sm:$0xff]
      %v322 = vld [vmem:[%s314 + $0x8] sm:$0xff]
      %v323 = vld [vmem:[%s314 + $0x10] sm:$0xff]
      %v324 = vld [vmem:[%s314 + $0x18] sm:$0xff]
      %325 = vxpose.xlu0.b32.start [1/16] %v321, 128
      %326 = vxpose.xlu0.b32.cont [2/16] %v322, 128
      %327 = vxpose.xlu0.b32.cont [3/16] %v323, 128
      %328 = vxpose.xlu0.b32.cont [4/16] %v324, 128
      %329 = vxpose.xlu0.b32.cont [5/16] 0.0, 128
      %330 = vxpose.xlu0.b32.cont [6/16] 0.0, 128
      %331 = vxpose.xlu0.b32.cont [7/16] 0.0, 128
      %332 = vxpose.xlu0.b32.cont [8/16] 0.0, 128
      %333 = vxpose.xlu0.b32.cont [9/16] 0.0, 128
      %334 = vxpose.xlu0.b32.cont [10/16] 0.0, 128
      %335 = vxpose.xlu0.b32.cont [11/16] 0.0, 128
      %336 = vxpose.xlu0.b32.cont [12/16] 0.0, 128
      %337 = vxpose.xlu0.b32.cont [13/16] 0.0, 128
      %338 = vxpose.xlu0.b32.cont [14/16] 0.0, 128
      %339 = vxpose.xlu0.b32.cont [15/16] 0.0, 128
      %340 = vxpose.xlu0.b32.end [16/16] 0.0, 128
      %v341 = vpop.trf.xlu0
      %v342 = vpop.trf.xlu0
      %v343 = vpop.trf.xlu0
      %v344 = vpop.trf.xlu0
      %v345 = vpop.trf.xlu0
      %v346 = vpop.trf.xlu0
      %v347 = vpop.trf.xlu0
      %v348 = vpop.trf.xlu0
      %v349 = vpop.trf.xlu0
      %v350 = vpop.trf.xlu0
      %v351 = vpop.trf.xlu0
      %v352 = vpop.trf.xlu0
      %v353 = vpop.trf.xlu0
      %v354 = vpop.trf.xlu0
      %v355 = vpop.trf.xlu0
      %v356 = vpop.trf.xlu0
      %v357 = vld [vmem:[%s0] sm:$0xff]
      %v358 = vld [vmem:[%s0 + $0x8] sm:$0xff]
      %v359 = vadd.f32 %v341, %v357
      %v360 = vadd.f32 %v342, %v358
      %v361 = vlaneseq
      %v362 = vshrl.u32 %v361, 7
      %v363 = vadd.s32 %v362, 8
      %vm364 = vcmp.lt.s32.totalorder %v362, 0
      %v365 = vsub.s32 0, %v362
      %v366 = vsel %vm364, %v365, %v362
      %v367 = vshrl.u32 %v366, 4
      %v368 = vand.u32 %v366, 15
      %v369 = vsub.s32 0, %v368
      %v370 = vsel %vm364, %v369, %v368
      %vm371 = vcmp.lt.s32.totalorder %v363, 0
      %v372 = vsub.s32 0, %v363
      %v373 = vsel %vm371, %v372, %v363
      %v374 = vshrl.u32 %v373, 4
      %v375 = vand.u32 %v373, 15
      %v376 = vsub.s32 0, %v375
      %v377 = vsel %vm371, %v376, %v375
      %vm378 = vcmp.ne.s32.totalorder %v370, 0
      %vm379 = vcmp.ne.s32.totalorder %v377, 0
      %vm380 = vcmp.lt.s32.totalorder %v370, 0
      %vm381 = vcmp.lt.s32.totalorder %v377, 0
      %vm382 = vmand %vm380, %vm378
      %vm383 = vmand %vm381, %vm379
      %v384 = vadd.s32 %v370, 16
      %v385 = vadd.s32 %v377, 16
      %v386 = vsel %vm382, %v384, %v370
      %v387 = vsel %vm383, %v385, %v377
      %v388 = vadd.s32 %v386, 4294967294
      %v389 = vadd.s32 %v387, 4294967294
      %vm390 = vcmp.ge.s32.totalorder %v388, 0
      %vm391 = vcmp.ge.s32.totalorder %v389, 0
      %vm392 = vcmp.lt.s32.totalorder %v388, 16
      %vm393 = vcmp.lt.s32.totalorder %v389, 16
      %vm394 = vmand %vm390, %vm392
      %vm395 = vmand %vm391, %vm393
      %v396 = vsel %vm394, 1, 0
      %v397 = vsel %vm395, 1, 0
      %v398 = vcvt.s32.f32 %v396
      %v399 = vcvt.s32.f32 %v397
      %v400 = vadd.s32 %v386, 4294967295
      %v401 = vadd.s32 %v387, 4294967295
      %vm402 = vcmp.ge.s32.totalorder %v400, 0
      %vm403 = vcmp.ge.s32.totalorder %v401, 0
      %vm404 = vcmp.lt.s32.totalorder %v400, 16
      %vm405 = vcmp.lt.s32.totalorder %v401, 16
      %vm406 = vmand %vm402, %vm404
      %vm407 = vmand %vm403, %vm405
      %v408 = vsel %vm406, 1, 0
      %v409 = vsel %vm407, 1, 0
      %v410 = vcvt.s32.f32 %v408
      %v411 = vcvt.s32.f32 %v409
      %v412 = vadd.s32 %v386, 1
      %v413 = vadd.s32 %v387, 1
      %vm414 = vcmp.ge.s32.totalorder %v412, 0
      %vm415 = vcmp.ge.s32.totalorder %v413, 0
      %vm416 = vcmp.lt.s32.totalorder %v412, 16
      %vm417 = vcmp.lt.s32.totalorder %v413, 16
      %vm418 = vmand %vm414, %vm416
      %vm419 = vmand %vm415, %vm417
      %v420 = vsel %vm418, 1, 0
      %v421 = vsel %vm419, 1, 0
      %v422 = vcvt.s32.f32 %v420
      %v423 = vcvt.s32.f32 %v421
      %v424 = vadd.s32 %v386, 2
      %v425 = vadd.s32 %v387, 2
      %vm426 = vcmp.ge.s32.totalorder %v424, 0
      %vm427 = vcmp.ge.s32.totalorder %v425, 0
      %vm428 = vcmp.lt.s32.totalorder %v424, 16
      %vm429 = vcmp.lt.s32.totalorder %v425, 16
      %vm430 = vmand %vm426, %vm428
      %vm431 = vmand %vm427, %vm429
      %v432 = vsel %vm430, 1, 0
      %v433 = vsel %vm431, 1, 0
      %v434 = vcvt.s32.f32 %v432
      %v435 = vcvt.s32.f32 %v433
      %v436 = vld [vmem:[%s7] sm:$0x1]
      %v437 = vld [vmem:[%s7 + $0x1] sm:$0x1]
      %vm438 = vcmask 261120
      %v439 = vsel %vm438, %v359, 0.0
      %440 = vadd.xlane.f32.xlu0 %v439
      %v441 = vpop.xlane.xlu0 %440
      %v442 = vsel %vm438, %v360, 0.0
      %443 = vadd.xlane.f32.xlu0 %v442
      %v444 = vpop.xlane.xlu0 %443
      %v445 = vrcp.pop 32.0
      %v446 = vmul.f32 32.0, %v445
      %v447 = vsub.f32 1.0, %v446
      %v448 = vmul.f32 %v445, %v447
      %v449 = vadd.f32 %v445, %v448
      %vm450 = vweird.f32 %v445
      %v451 = vsel %vm450, %v445, %v449
      %v452 = vmul.f32 %v441, %v451
      %v453 = vmul.f32 %v444, %v451
      %v454 = vmul.f32 %v359, %v359
      %v455 = vmul.f32 %v360, %v360
      %v456 = vsel %vm438, %v454, 0.0
      %457 = vadd.xlane.f32.xlu0 %v456
      %v458 = vpop.xlane.xlu0 %457
      %v459 = vsel %vm438, %v455, 0.0
      %460 = vadd.xlane.f32.xlu0 %v459
      %v461 = vpop.xlane.xlu0 %460
      %v462 = vmul.f32 %v458, %v451
      %v463 = vmul.f32 %v461, %v451
      %v464 = vmul.f32 %v452, %v452
      %v465 = vmul.f32 %v453, %v453
      %v466 = vsub.f32 %v462, %v464
      %v467 = vsub.f32 %v463, %v465
      %v468 = vsub.f32 %v359, %v452
      %v469 = vsub.f32 %v360, %v453
      %v470 = vadd.f32 %v466, 1e-05
      %v471 = vadd.f32 %v467, 1e-05
      %v472 = vrsqrt.pop %v470
      %v473 = vmul.f32 %v472, %v470
      %v474 = vmul.f32 %v473, %v472
      %v475 = vmul.f32 0.5, %v474
      %v476 = vsub.f32 1.5, %v475
      %v477 = vmul.f32 %v472, %v476
      %vm478 = vweird.f32 %v470
      %vm479 = vweird.f32 %v472
      %vm480 = vmor %vm478, %vm479
      %v481 = vsel %vm480, %v472, %v477
      %v482 = vrsqrt.pop %v471
      %v483 = vmul.f32 %v482, %v471
      %v484 = vmul.f32 %v483, %v482
      %v485 = vmul.f32 0.5, %v484
      %v486 = vsub.f32 1.5, %v485
      %v487 = vmul.f32 %v482, %v486
      %vm488 = vweird.f32 %v471
      %vm489 = vweird.f32 %v482
      %vm490 = vmor %vm488, %vm489
      %v491 = vsel %vm490, %v482, %v487
      %v492 = vmul.f32 %v468, %v481
      %v493 = vmul.f32 %v469, %v491
      %v494 = vperm.slane %v436, 0
      %v495 = vmul.f32 %v492, %v494
      %v496 = vmul.f32 %v493, %v494
      %v497 = vperm.slane %v437, 0
      %v498 = vadd.f32 %v495, %v497
      %v499 = vadd.f32 %v496, %v497
      %v500 = vld [vmem:[%s3] sm:$0x1f]
      %v501 = vperm.slane %v500, 2
      %v502 = vmul.f32 %v498, %v501
      %v503 = vmul.f32 %v499, %v501
      %v504 = vrot.slane %v498, 6
      %v505 = vrot.slane %v499, 6
      %vm506 = vcmp.lt.s32.totalorder %v362, 2
      %v507 = vsel %vm506, %v504, %v505
      %v508 = vsel %vm506, %v505, %v504
      %v509 = vmul.f32 %v508, %v398
      %v510 = vmul.f32 %v507, %v399
      %v511 = vperm.slane %v500, 0
      %v512 = vmul.f32 %v509, %v511
      %v513 = vmul.f32 %v510, %v511
      %v514 = vadd.f32 %v502, %v512
      %v515 = vadd.f32 %v503, %v513
      %v516 = vrot.slane %v498, 7
      %v517 = vrot.slane %v499, 7
      %vm518 = vcmp.lt.s32.totalorder %v362, 1
      %v519 = vsel %vm518, %v516, %v517
      %v520 = vsel %vm518, %v517, %v516
      %v521 = vmul.f32 %v520, %v410
      %v522 = vmul.f32 %v519, %v411
      %v523 = vperm.slane %v500, 1
      %v524 = vmul.f32 %v521, %v523
      %v525 = vmul.f32 %v522, %v523
      %v526 = vadd.f32 %v514, %v524
      %v527 = vadd.f32 %v515, %v525
      %v528 = vrot.slane %v498, 1
      %v529 = vrot.slane %v499, 1
      %vm530 = vcmp.lt.s32.totalorder %v362, 7
      %v531 = vsel %vm530, %v528, %v529
      %v532 = vsel %vm530, %v529, %v528
      %v533 = vmul.f32 %v531, %v422
      %v534 = vmul.f32 %v532, %v423
      %v535 = vperm.slane %v500, 3
      %v536 = vmul.f32 %v533, %v535
      %v537 = vmul.f32 %v534, %v535
      %v538 = vadd.f32 %v526, %v536
      %v539 = vadd.f32 %v527, %v537
      %v540 = vrot.slane %v498, 2
      %v541 = vrot.slane %v499, 2
      %vm542 = vcmp.lt.s32.totalorder %v362, 6
      %v543 = vsel %vm542, %v540, %v541
      %v544 = vsel %vm542, %v541, %v540
      %v545 = vmul.f32 %v543, %v434
      %v546 = vmul.f32 %v544, %v435
      %v547 = vperm.slane %v500, 4
      %v548 = vmul.f32 %v545, %v547
      %v549 = vmul.f32 %v546, %v547
      %v550 = vadd.f32 %v538, %v548
      %v551 = vadd.f32 %v539, %v549
      %v552 = vld [vmem:[%s4] sm:$0xf]
      %v553 = vld [vmem:[%s4 + $0x4] sm:$0xf]
      %v554 = vld [vmem:[%s4 + $0x8] sm:$0xf]
      %v555 = vld [vmem:[%s4 + $0xc] sm:$0xf]
      %v556 = vpack.c.bf16 %v551, %v550
      %v557 = vld [vmem:[%s7 + $0x2] sm:$0x1]
      %v558 = vperm.slane %v557, 0
      %v563 = vunpack.c.l.b16 %v552
      %v564 = vunpack.c.l.b16 %v553
      %v565 = vunpack.c.l.b16 %v554
      %v566 = vunpack.c.l.b16 %v555
      %v567 = vpack.c.b16 %v564, %v563
      %v568 = vpack.c.b16 %v566, %v565
      %v572 = vsel %vm438, %v556, 0
      %574 = vmatpush.bf16.msra.mxu0 0
      %575 = vmatpush.bf16.msra.mxu0 0
      %576 = vmatpush.bf16.msra.mxu0 0
      %577 = vmatpush.bf16.msra.mxu0 0
      %578 = vmatpush.bf16.msra.mxu0 0
      %579 = vmatpush.bf16.msra.mxu0 0
      %580 = vmatpush.bf16.msra.mxu0 %v568
      %581 = vmatpush.bf16.msra.mxu0 %v567
      %582 = vmatmul.bf16.gmra.mxu0 %v572
      %v583 = vpop.f32.mrf.mxu0
      %v584 = vadd.f32 %v558, %v583
      %v585 = vpop.f32.mrf.mxu0
      %v586 = vadd.f32 %v558, %v585
      %587 = vdwg.mxu0
      %v588 = vmax.f32 %v584, 0.0
      %v589 = vmax.f32 %v586, 0.0
      %v590 = vadd.f32 %v588, %v359
      %v591 = vadd.f32 %v589, %v360
      %v592 = vld [vmem:[%s7 + $0x3] sm:$0x1]
      %v593 = vld [vmem:[%s7 + $0x4] sm:$0x1]
      %v594 = vsel %vm438, %v590, 0.0
      %595 = vadd.xlane.f32.xlu0 %v594
      %v596 = vpop.xlane.xlu0 %595
      %v597 = vsel %vm438, %v591, 0.0
      %598 = vadd.xlane.f32.xlu0 %v597
      %v599 = vpop.xlane.xlu0 %598
      %v600 = vmul.f32 %v596, %v451
      %v601 = vmul.f32 %v599, %v451
      %v602 = vmul.f32 %v590, %v590
      %v603 = vmul.f32 %v591, %v591
      %v604 = vsel %vm438, %v602, 0.0
      %605 = vadd.xlane.f32.xlu0 %v604
      %v606 = vpop.xlane.xlu0 %605
      %v607 = vsel %vm438, %v603, 0.0
      %608 = vadd.xlane.f32.xlu0 %v607
      %v609 = vpop.xlane.xlu0 %608
      %v610 = vmul.f32 %v606, %v451
      %v611 = vmul.f32 %v609, %v451
      %v612 = vmul.f32 %v600, %v600
      %v613 = vmul.f32 %v601, %v601
      %v614 = vsub.f32 %v610, %v612
      %v615 = vsub.f32 %v611, %v613
      %v616 = vsub.f32 %v590, %v600
      %v617 = vsub.f32 %v591, %v601
      %v618 = vadd.f32 %v614, 1e-05
      %v619 = vadd.f32 %v615, 1e-05
      %v620 = vrsqrt.pop %v618
      %v621 = vmul.f32 %v620, %v618
      %v622 = vmul.f32 %v621, %v620
      %v623 = vmul.f32 0.5, %v622
      %v624 = vsub.f32 1.5, %v623
      %v625 = vmul.f32 %v620, %v624
      %vm626 = vweird.f32 %v618
      %vm627 = vweird.f32 %v620
      %vm628 = vmor %vm626, %vm627
      %v629 = vsel %vm628, %v620, %v625
      %v630 = vrsqrt.pop %v619
      %v631 = vmul.f32 %v630, %v619
      %v632 = vmul.f32 %v631, %v630
      %v633 = vmul.f32 0.5, %v632
      %v634 = vsub.f32 1.5, %v633
      %v635 = vmul.f32 %v630, %v634
      %vm636 = vweird.f32 %v619
      %vm637 = vweird.f32 %v630
      %vm638 = vmor %vm636, %vm637
      %v639 = vsel %vm638, %v630, %v635
      %v640 = vmul.f32 %v616, %v629
      %v641 = vmul.f32 %v617, %v639
      %v642 = vperm.slane %v592, 0
      %v643 = vmul.f32 %v640, %v642
      %v644 = vmul.f32 %v641, %v642
      %v645 = vperm.slane %v593, 0
      %v646 = vadd.f32 %v643, %v645
      %v647 = vadd.f32 %v644, %v645
      %s648 = scalar_lea.vmem %s3, 8
      %v649 = vld [vmem:[%s648] sm:$0x1f]
      %v650 = vperm.slane %v649, 2
      %v651 = vmul.f32 %v646, %v650
      %v652 = vmul.f32 %v647, %v650
      %v653 = vrot.slane %v646, 6
      %v654 = vrot.slane %v647, 6
      %v655 = vsel %vm506, %v653, %v654
      %v656 = vsel %vm506, %v654, %v653
      %v657 = vmul.f32 %v656, %v398
      %v658 = vmul.f32 %v655, %v399
      %v659 = vperm.slane %v649, 0
      %v660 = vmul.f32 %v657, %v659
      %v661 = vmul.f32 %v658, %v659
      %v662 = vadd.f32 %v651, %v660
      %v663 = vadd.f32 %v652, %v661
      %v664 = vrot.slane %v646, 7
      %v665 = vrot.slane %v647, 7
      %v666 = vsel %vm518, %v664, %v665
      %v667 = vsel %vm518, %v665, %v664
      %v668 = vmul.f32 %v667, %v410
      %v669 = vmul.f32 %v666, %v411
      %v670 = vperm.slane %v649, 1
      %v671 = vmul.f32 %v668, %v670
      %v672 = vmul.f32 %v669, %v670
      %v673 = vadd.f32 %v662, %v671
      %v674 = vadd.f32 %v663, %v672
      %v675 = vrot.slane %v646, 1
      %v676 = vrot.slane %v647, 1
      %v677 = vsel %vm530, %v675, %v676
      %v678 = vsel %vm530, %v676, %v675
      %v679 = vmul.f32 %v677, %v422
      %v680 = vmul.f32 %v678, %v423
      %v681 = vperm.slane %v649, 3
      %v682 = vmul.f32 %v679, %v681
      %v683 = vmul.f32 %v680, %v681
      %v684 = vadd.f32 %v673, %v682
      %v685 = vadd.f32 %v674, %v683
      %v686 = vrot.slane %v646, 2
      %v687 = vrot.slane %v647, 2
      %v688 = vsel %vm542, %v686, %v687
      %v689 = vsel %vm542, %v687, %v686
      %v690 = vmul.f32 %v688, %v434
      %v691 = vmul.f32 %v689, %v435
      %v692 = vperm.slane %v649, 4
      %v693 = vmul.f32 %v690, %v692
      %v694 = vmul.f32 %v691, %v692
      %v695 = vadd.f32 %v684, %v693
      %v696 = vadd.f32 %v685, %v694
      %s697 = scalar_lea.vmem %s4, 16
      %v698 = vld [vmem:[%s697] sm:$0xf]
      %v699 = vld [vmem:[%s697 + $0x4] sm:$0xf]
      %v700 = vld [vmem:[%s697 + $0x8] sm:$0xf]
      %v701 = vld [vmem:[%s697 + $0xc] sm:$0xf]
      %v702 = vpack.c.bf16 %v696, %v695
      %v703 = vld [vmem:[%s7 + $0x5] sm:$0x1]
      %v704 = vperm.slane %v703, 0
      %v709 = vunpack.c.l.b16 %v698
      %v710 = vunpack.c.l.b16 %v699
      %v711 = vunpack.c.l.b16 %v700
      %v712 = vunpack.c.l.b16 %v701
      %v713 = vpack.c.b16 %v710, %v709
      %v714 = vpack.c.b16 %v712, %v711
      %v718 = vsel %vm438, %v702, 0
      %720 = vmatpush.bf16.msra.mxu0 0
      %721 = vmatpush.bf16.msra.mxu0 0
      %722 = vmatpush.bf16.msra.mxu0 0
      %723 = vmatpush.bf16.msra.mxu0 0
      %724 = vmatpush.bf16.msra.mxu0 0
      %725 = vmatpush.bf16.msra.mxu0 0
      %726 = vmatpush.bf16.msra.mxu0 %v714
      %727 = vmatpush.bf16.msra.mxu0 %v713
      %728 = vmatmul.bf16.gmra.mxu0 %v718
      %v729 = vpop.f32.mrf.mxu0
      %v730 = vadd.f32 %v704, %v729
      %v731 = vpop.f32.mrf.mxu0
      %v732 = vadd.f32 %v704, %v731
      %733 = vdwg.mxu0
      %v734 = vmax.f32 %v730, 0.0
      %v735 = vmax.f32 %v732, 0.0
      %v736 = vadd.f32 %v734, %v590
      %v737 = vadd.f32 %v735, %v591
      %v738 = vld [vmem:[%s7 + $0x6] sm:$0x1]
      %v739 = vld [vmem:[%s7 + $0x7] sm:$0x1]
      %v740 = vsel %vm438, %v736, 0.0
      %741 = vadd.xlane.f32.xlu0 %v740
      %v742 = vpop.xlane.xlu0 %741
      %v743 = vsel %vm438, %v737, 0.0
      %744 = vadd.xlane.f32.xlu0 %v743
      %v745 = vpop.xlane.xlu0 %744
      %v746 = vmul.f32 %v742, %v451
      %v747 = vmul.f32 %v745, %v451
      %v748 = vmul.f32 %v736, %v736
      %v749 = vmul.f32 %v737, %v737
      %v750 = vsel %vm438, %v748, 0.0
      %751 = vadd.xlane.f32.xlu0 %v750
      %v752 = vpop.xlane.xlu0 %751
      %v753 = vsel %vm438, %v749, 0.0
      %754 = vadd.xlane.f32.xlu0 %v753
      %v755 = vpop.xlane.xlu0 %754
      %v756 = vmul.f32 %v752, %v451
      %v757 = vmul.f32 %v755, %v451
      %v758 = vmul.f32 %v746, %v746
      %v759 = vmul.f32 %v747, %v747
      %v760 = vsub.f32 %v756, %v758
      %v761 = vsub.f32 %v757, %v759
      %v762 = vsub.f32 %v736, %v746
      %v763 = vsub.f32 %v737, %v747
      %v764 = vadd.f32 %v760, 1e-05
      %v765 = vadd.f32 %v761, 1e-05
      %v766 = vrsqrt.pop %v764
      %v767 = vmul.f32 %v766, %v764
      %v768 = vmul.f32 %v767, %v766
      %v769 = vmul.f32 0.5, %v768
      %v770 = vsub.f32 1.5, %v769
      %v771 = vmul.f32 %v766, %v770
      %vm772 = vweird.f32 %v764
      %vm773 = vweird.f32 %v766
      %vm774 = vmor %vm772, %vm773
      %v775 = vsel %vm774, %v766, %v771
      %v776 = vrsqrt.pop %v765
      %v777 = vmul.f32 %v776, %v765
      %v778 = vmul.f32 %v777, %v776
      %v779 = vmul.f32 0.5, %v778
      %v780 = vsub.f32 1.5, %v779
      %v781 = vmul.f32 %v776, %v780
      %vm782 = vweird.f32 %v765
      %vm783 = vweird.f32 %v776
      %vm784 = vmor %vm782, %vm783
      %v785 = vsel %vm784, %v776, %v781
      %v786 = vmul.f32 %v762, %v775
      %v787 = vmul.f32 %v763, %v785
      %v788 = vperm.slane %v738, 0
      %v789 = vmul.f32 %v786, %v788
      %v790 = vmul.f32 %v787, %v788
      %v791 = vperm.slane %v739, 0
      %v792 = vadd.f32 %v789, %v791
      %v793 = vadd.f32 %v790, %v791
      %v794 = vld [vmem:[%s5] sm:$0xf]
      %v795 = vld [vmem:[%s5 + $0x4] sm:$0xf]
      %v796 = vld [vmem:[%s5 + $0x8] sm:$0xf]
      %v797 = vld [vmem:[%s5 + $0xc] sm:$0xf]
      %v798 = vpack.c.bf16 %v793, %v792
      %v803 = vunpack.c.l.b16 %v794
      %v804 = vunpack.c.l.b16 %v795
      %v805 = vunpack.c.l.b16 %v796
      %v806 = vunpack.c.l.b16 %v797
      %v807 = vpack.c.b16 %v804, %v803
      %v808 = vpack.c.b16 %v806, %v805
      %v812 = vsel %vm438, %v798, 0
      %814 = vmatpush.bf16.msra.mxu0 0
      %815 = vmatpush.bf16.msra.mxu0 0
      %816 = vmatpush.bf16.msra.mxu0 0
      %817 = vmatpush.bf16.msra.mxu0 0
      %818 = vmatpush.bf16.msra.mxu0 0
      %819 = vmatpush.bf16.msra.mxu0 0
      %820 = vmatpush.bf16.msra.mxu0 %v808
      %821 = vmatpush.bf16.msra.mxu0 %v807
      %822 = vmatmul.bf16.gmra.mxu0 %v812
      %v823 = vpop.f32.mrf.mxu0
      %v824 = vadd.f32 0.0, %v823
      %v825 = vpop.f32.mrf.mxu0
      %v826 = vadd.f32 0.0, %v825
      %827 = vdwg.mxu0
      %v828 = vpack.c.bf16 %v824, %v824
      %v829 = vpack.c.bf16 %v826, %v826
      %v830 = vld [vmem:[%s309] sm:$0x1]
      %v831 = vsub.f32 %v830, 1.0
      %v832 = vmul.f32 %v831, 1e+30
      %v833 = vlaneseq
      %v834 = vand.u32 %v833, 127
      %vm835 = vcmp.ge.s32.totalorder %v834, 0
      %vm836 = vcmp.lt.s32.totalorder %v834, 8
      %vm837 = vmand %vm835, %vm836
      %v838 = vsel %vm837, 1, 0
      %v839 = vcvt.s32.f32 %v838
      %v840 = vpack.c.bf16 %v839, %v839
      %v841 = vunpack.c.l.bf16 %v828
      %v842 = vunpack.c.l.bf16 %v829
      %v843 = vunpack.c.l.bf16 %v840
      %v844 = vmul.f32 %v841, %v843
      %v845 = vmul.f32 %v842, %v843
      %v846 = vpack.c.bf16 %v844, %v844
      %v847 = vpack.c.bf16 %v845, %v845
      %v849 = vperm.slane %v832, 0
      %v853 = vunpack.c.l.b16 %v846
      %v854 = vunpack.c.l.b16 %v847
      %v855 = vpack.c.b16 %v854, %v853
      %v858 = vunpack.c.l.b16 %v828
      %v859 = vunpack.c.l.b16 %v829
      %v860 = vpack.c.b16 %v859, %v858
      %861 = vrot.lane.b32.xlu0 %v860, 96
      %v862 = vpop.permute.xlu0 %861
      %v864 = vsel %vm438, %v855, 0
      %v867 = vsel %vm438, %v862, 0
      %869 = vmatpush.bf16.xpose.msra.mxu0 0
      %870 = vmatpush.bf16.xpose.msra.mxu0 0
      %871 = vmatpush.bf16.xpose.msra.mxu0 0
      %872 = vmatpush.bf16.xpose.msra.mxu0 0
      %873 = vmatpush.bf16.xpose.msra.mxu0 0
      %874 = vmatpush.bf16.xpose.msra.mxu0 0
      %875 = vmatpush.bf16.xpose.msra.mxu0 0
      %876 = vmatpush.bf16.xpose.msra.mxu0 %v867
      %877 = vmatmul.bf16.gmra.mxu0 %v864
      %v878 = vpop.f32.mrf.mxu0
      %v879 = vadd.f32 %v849, %v878
      %v880 = vpop.f32.mrf.mxu0
      %v881 = vadd.f32 %v849, %v880
      %882 = vdwg.mxu0
      %vm883 = vcmask 130048
      %v884 = vsel %vm883, %v879, -inf
      %885 = vmax.xlane.f32.xlu0 %v884
      %v886 = vpop.xlane.xlu0 %885
      %v887 = vsel %vm883, %v881, -inf
      %888 = vmax.xlane.f32.xlu0 %v887
      %v889 = vpop.xlane.xlu0 %888
      %v890 = vsub.f32 %v879, %v886
      %v891 = vsub.f32 %v881, %v889
      %v892 = vmul.f32 %v890, 1.442695
      %v893 = vpow.pop %v892
      %v894 = vmul.f32 %v891, 1.442695
      %v895 = vpow.pop %v894
      %v896 = vsel %vm883, %v893, 0.0
      %897 = vadd.xlane.f32.xlu0 %v896
      %v898 = vpop.xlane.xlu0 %897
      %v899 = vsel %vm883, %v895, 0.0
      %900 = vadd.xlane.f32.xlu0 %v899
      %v901 = vpop.xlane.xlu0 %900
      %v902 = vrcp.pop %v898
      %v903 = vrcp.pop %v901
      %v904 = vmul.f32 %v893, %v902
      %v905 = vmul.f32 %v895, %v903
      %v906 = vpack.c.bf16 %v904, %v904
      %v907 = vpack.c.bf16 %v905, %v905
      %909 = vrot.lane.b32.xlu0 %v843, 64
      %v910 = vpop.permute.xlu0 %909
      %v912 = vmul.f32 %v841, %v910
      %v913 = vmul.f32 %v842, %v910
      %v914 = vpack.c.bf16 %v912, %v912
      %v915 = vpack.c.bf16 %v913, %v913
      %vm916 = vcmp.ge.s32.totalorder %v834, 8
      %vm917 = vcmp.lt.s32.totalorder %v834, 16
      %vm918 = vmand %vm916, %vm917
      %v919 = vsel %vm918, 1, 0
      %v920 = vcvt.s32.f32 %v919
      %v921 = vpack.c.bf16 %v920, %v920
      %v922 = vunpack.c.l.bf16 %v921
      %v923 = vmul.f32 %v841, %v922
      %v924 = vmul.f32 %v842, %v922
      %v925 = vpack.c.bf16 %v923, %v923
      %v926 = vpack.c.bf16 %v924, %v924
      %v929 = vunpack.c.l.b16 %v925
      %v930 = vunpack.c.l.b16 %v926
      %v931 = vpack.c.b16 %v930, %v929
      %v933 = vsel %vm438, %v931, 0
      %935 = vmatpush.bf16.xpose.msra.mxu0 0
      %936 = vmatpush.bf16.xpose.msra.mxu0 0
      %937 = vmatpush.bf16.xpose.msra.mxu0 0
      %938 = vmatpush.bf16.xpose.msra.mxu0 0
      %939 = vmatpush.bf16.xpose.msra.mxu0 0
      %940 = vmatpush.bf16.xpose.msra.mxu0 0
      %941 = vmatpush.bf16.xpose.msra.mxu0 0
      %942 = vmatpush.bf16.xpose.msra.mxu0 %v867
      %943 = vmatmul.bf16.gmra.mxu0 %v933
      %v944 = vpop.f32.mrf.mxu0
      %v945 = vadd.f32 %v849, %v944
      %v946 = vpop.f32.mrf.mxu0
      %v947 = vadd.f32 %v849, %v946
      %948 = vdwg.mxu0
      %v949 = vsel %vm883, %v945, -inf
      %950 = vmax.xlane.f32.xlu0 %v949
      %v951 = vpop.xlane.xlu0 %950
      %v952 = vsel %vm883, %v947, -inf
      %953 = vmax.xlane.f32.xlu0 %v952
      %v954 = vpop.xlane.xlu0 %953
      %v955 = vsub.f32 %v945, %v951
      %v956 = vsub.f32 %v947, %v954
      %v957 = vmul.f32 %v955, 1.442695
      %v958 = vpow.pop %v957
      %v959 = vmul.f32 %v956, 1.442695
      %v960 = vpow.pop %v959
      %v961 = vsel %vm883, %v958, 0.0
      %962 = vadd.xlane.f32.xlu0 %v961
      %v963 = vpop.xlane.xlu0 %962
      %v964 = vsel %vm883, %v960, 0.0
      %965 = vadd.xlane.f32.xlu0 %v964
      %v966 = vpop.xlane.xlu0 %965
      %v967 = vrcp.pop %v963
      %v968 = vrcp.pop %v966
      %v969 = vmul.f32 %v958, %v967
      %v970 = vmul.f32 %v960, %v968
      %v971 = vpack.c.bf16 %v969, %v969
      %v972 = vpack.c.bf16 %v970, %v970
      %974 = vrot.lane.b32.xlu0 %v922, 64
      %v975 = vpop.permute.xlu0 %974
      %v977 = vmul.f32 %v841, %v975
      %v978 = vmul.f32 %v842, %v975
      %v979 = vpack.c.bf16 %v977, %v977
      %v980 = vpack.c.bf16 %v978, %v978
      %v983 = vunpack.c.l.b16 %v971
      %v984 = vunpack.c.l.b16 %v972
      %v985 = vpack.c.b16 %v984, %v983
      %v988 = vunpack.c.l.b16 %v979
      %v989 = vunpack.c.l.b16 %v980
      %v990 = vpack.c.b16 %v989, %v988
      %991 = vrot.lane.b32.xlu0 %v990, 64
      %v992 = vpop.permute.xlu0 %991
      %v995 = vsel %vm883, %v985, 0
      %997 = vmatpush.bf16.msra.mxu0 0
      %998 = vmatpush.bf16.msra.mxu0 0
      %999 = vmatpush.bf16.msra.mxu0 0
      %1000 = vmatpush.bf16.msra.mxu0 0
      %1001 = vmatpush.bf16.msra.mxu0 0
      %1002 = vmatpush.bf16.msra.mxu0 0
      %1003 = vmatpush.bf16.msra.mxu0 0
      %1004 = vmatpush.bf16.msra.mxu0 %v992
      %1005 = vmatmul.bf16.gmra.mxu0 %v995
      %v1006 = vpop.f32.mrf.mxu0
      %v1007 = vadd.f32 0.0, %v1006
      %v1008 = vpop.f32.mrf.mxu0
      %v1009 = vadd.f32 0.0, %v1008
      %1010 = vdwg.mxu0
      %v1013 = vunpack.c.l.b16 %v906
      %v1014 = vunpack.c.l.b16 %v907
      %v1015 = vpack.c.b16 %v1014, %v1013
      %v1018 = vunpack.c.l.b16 %v914
      %v1019 = vunpack.c.l.b16 %v915
      %v1020 = vpack.c.b16 %v1019, %v1018
      %1021 = vrot.lane.b32.xlu0 %v1020, 64
      %v1022 = vpop.permute.xlu0 %1021
      %v1025 = vsel %vm883, %v1015, 0
      %1027 = vmatpush.bf16.msra.mxu0 0
      %1028 = vmatpush.bf16.msra.mxu0 0
      %1029 = vmatpush.bf16.msra.mxu0 0
      %1030 = vmatpush.bf16.msra.mxu0 0
      %1031 = vmatpush.bf16.msra.mxu0 0
      %1032 = vmatpush.bf16.msra.mxu0 0
      %1033 = vmatpush.bf16.msra.mxu0 0
      %1034 = vmatpush.bf16.msra.mxu0 %v1022
      %1035 = vmatmul.bf16.gmra.mxu0 %v1025
      %v1036 = vpop.f32.mrf.mxu0
      %v1037 = vadd.f32 %v1007, %v1036
      %v1038 = vpop.f32.mrf.mxu0
      %v1039 = vadd.f32 %v1009, %v1038
      %1040 = vdwg.mxu0
      %vm1041 = vcmp.ge.s32.totalorder %v834, 16
      %vm1042 = vcmp.lt.s32.totalorder %v834, 24
      %vm1043 = vmand %vm1041, %vm1042
      %v1044 = vsel %vm1043, 1, 0
      %v1045 = vcvt.s32.f32 %v1044
      %v1046 = vpack.c.bf16 %v1045, %v1045
      %v1047 = vunpack.c.l.bf16 %v1046
      %v1048 = vmul.f32 %v841, %v1047
      %v1049 = vmul.f32 %v842, %v1047
      %v1050 = vpack.c.bf16 %v1048, %v1048
      %v1051 = vpack.c.bf16 %v1049, %v1049
      %v1054 = vunpack.c.l.b16 %v1050
      %v1055 = vunpack.c.l.b16 %v1051
      %v1056 = vpack.c.b16 %v1055, %v1054
      %v1058 = vsel %vm438, %v1056, 0
      %1060 = vmatpush.bf16.xpose.msra.mxu0 0
      %1061 = vmatpush.bf16.xpose.msra.mxu0 0
      %1062 = vmatpush.bf16.xpose.msra.mxu0 0
      %1063 = vmatpush.bf16.xpose.msra.mxu0 0
      %1064 = vmatpush.bf16.xpose.msra.mxu0 0
      %1065 = vmatpush.bf16.xpose.msra.mxu0 0
      %1066 = vmatpush.bf16.xpose.msra.mxu0 0
      %1067 = vmatpush.bf16.xpose.msra.mxu0 %v867
      %1068 = vmatmul.bf16.gmra.mxu0 %v1058
      %v1069 = vpop.f32.mrf.mxu0
      %v1070 = vadd.f32 %v849, %v1069
      %v1071 = vpop.f32.mrf.mxu0
      %v1072 = vadd.f32 %v849, %v1071
      %1073 = vdwg.mxu0
      %v1074 = vsel %vm883, %v1070, -inf
      %1075 = vmax.xlane.f32.xlu0 %v1074
      %v1076 = vpop.xlane.xlu0 %1075
      %v1077 = vsel %vm883, %v1072, -inf
      %1078 = vmax.xlane.f32.xlu0 %v1077
      %v1079 = vpop.xlane.xlu0 %1078
      %v1080 = vsub.f32 %v1070, %v1076
      %v1081 = vsub.f32 %v1072, %v1079
      %v1082 = vmul.f32 %v1080, 1.442695
      %v1083 = vpow.pop %v1082
      %v1084 = vmul.f32 %v1081, 1.442695
      %v1085 = vpow.pop %v1084
      %v1086 = vsel %vm883, %v1083, 0.0
      %1087 = vadd.xlane.f32.xlu0 %v1086
      %v1088 = vpop.xlane.xlu0 %1087
      %v1089 = vsel %vm883, %v1085, 0.0
      %1090 = vadd.xlane.f32.xlu0 %v1089
      %v1091 = vpop.xlane.xlu0 %1090
      %v1092 = vrcp.pop %v1088
      %v1093 = vrcp.pop %v1091
      %v1094 = vmul.f32 %v1083, %v1092
      %v1095 = vmul.f32 %v1085, %v1093
      %v1096 = vpack.c.bf16 %v1094, %v1094
      %v1097 = vpack.c.bf16 %v1095, %v1095
      %1099 = vrot.lane.b32.xlu0 %v1047, 64
      %v1100 = vpop.permute.xlu0 %1099
      %v1102 = vmul.f32 %v841, %v1100
      %v1103 = vmul.f32 %v842, %v1100
      %v1104 = vpack.c.bf16 %v1102, %v1102
      %v1105 = vpack.c.bf16 %v1103, %v1103
      %v1108 = vunpack.c.l.b16 %v1096
      %v1109 = vunpack.c.l.b16 %v1097
      %v1110 = vpack.c.b16 %v1109, %v1108
      %v1113 = vunpack.c.l.b16 %v1104
      %v1114 = vunpack.c.l.b16 %v1105
      %v1115 = vpack.c.b16 %v1114, %v1113
      %1116 = vrot.lane.b32.xlu0 %v1115, 64
      %v1117 = vpop.permute.xlu0 %1116
      %v1120 = vsel %vm883, %v1110, 0
      %1122 = vmatpush.bf16.msra.mxu0 0
      %1123 = vmatpush.bf16.msra.mxu0 0
      %1124 = vmatpush.bf16.msra.mxu0 0
      %1125 = vmatpush.bf16.msra.mxu0 0
      %1126 = vmatpush.bf16.msra.mxu0 0
      %1127 = vmatpush.bf16.msra.mxu0 0
      %1128 = vmatpush.bf16.msra.mxu0 0
      %1129 = vmatpush.bf16.msra.mxu0 %v1117
      %1130 = vmatmul.bf16.gmra.mxu0 %v1120
      %v1131 = vpop.f32.mrf.mxu0
      %v1132 = vadd.f32 0.0, %v1131
      %v1133 = vpop.f32.mrf.mxu0
      %v1134 = vadd.f32 0.0, %v1133
      %1135 = vdwg.mxu0
      %v1136 = vadd.f32 %v1037, %v1132
      %v1137 = vadd.f32 %v1039, %v1134
      %vm1138 = vcmp.ge.s32.totalorder %v834, 24
      %vm1139 = vcmp.lt.s32.totalorder %v834, 32
      %vm1140 = vmand %vm1138, %vm1139
      %v1141 = vsel %vm1140, 1, 0
      %v1142 = vcvt.s32.f32 %v1141
      %v1143 = vpack.c.bf16 %v1142, %v1142
      %v1144 = vunpack.c.l.bf16 %v1143
      %v1145 = vmul.f32 %v841, %v1144
      %v1146 = vmul.f32 %v842, %v1144
      %v1147 = vpack.c.bf16 %v1145, %v1145
      %v1148 = vpack.c.bf16 %v1146, %v1146
      %v1151 = vunpack.c.l.b16 %v1147
      %v1152 = vunpack.c.l.b16 %v1148
      %v1153 = vpack.c.b16 %v1152, %v1151
      %v1155 = vsel %vm438, %v1153, 0
      %1157 = vmatpush.bf16.xpose.msra.mxu0 0
      %1158 = vmatpush.bf16.xpose.msra.mxu0 0
      %1159 = vmatpush.bf16.xpose.msra.mxu0 0
      %1160 = vmatpush.bf16.xpose.msra.mxu0 0
      %1161 = vmatpush.bf16.xpose.msra.mxu0 0
      %1162 = vmatpush.bf16.xpose.msra.mxu0 0
      %1163 = vmatpush.bf16.xpose.msra.mxu0 0
      %1164 = vmatpush.bf16.xpose.msra.mxu0 %v867
      %1165 = vmatmul.bf16.gmra.mxu0 %v1155
      %v1166 = vpop.f32.mrf.mxu0
      %v1167 = vadd.f32 %v849, %v1166
      %v1168 = vpop.f32.mrf.mxu0
      %v1169 = vadd.f32 %v849, %v1168
      %1170 = vdwg.mxu0
      %v1171 = vsel %vm883, %v1167, -inf
      %1172 = vmax.xlane.f32.xlu0 %v1171
      %v1173 = vpop.xlane.xlu0 %1172
      %v1174 = vsel %vm883, %v1169, -inf
      %1175 = vmax.xlane.f32.xlu0 %v1174
      %v1176 = vpop.xlane.xlu0 %1175
      %v1177 = vsub.f32 %v1167, %v1173
      %v1178 = vsub.f32 %v1169, %v1176
      %v1179 = vmul.f32 %v1177, 1.442695
      %v1180 = vpow.pop %v1179
      %v1181 = vmul.f32 %v1178, 1.442695
      %v1182 = vpow.pop %v1181
      %v1183 = vsel %vm883, %v1180, 0.0
      %1184 = vadd.xlane.f32.xlu0 %v1183
      %v1185 = vpop.xlane.xlu0 %1184
      %v1186 = vsel %vm883, %v1182, 0.0
      %1187 = vadd.xlane.f32.xlu0 %v1186
      %v1188 = vpop.xlane.xlu0 %1187
      %v1189 = vrcp.pop %v1185
      %v1190 = vrcp.pop %v1188
      %v1191 = vmul.f32 %v1180, %v1189
      %v1192 = vmul.f32 %v1182, %v1190
      %v1193 = vpack.c.bf16 %v1191, %v1191
      %v1194 = vpack.c.bf16 %v1192, %v1192
      %1196 = vrot.lane.b32.xlu0 %v1144, 64
      %v1197 = vpop.permute.xlu0 %1196
      %v1199 = vmul.f32 %v841, %v1197
      %v1200 = vmul.f32 %v842, %v1197
      %v1201 = vpack.c.bf16 %v1199, %v1199
      %v1202 = vpack.c.bf16 %v1200, %v1200
      %v1205 = vunpack.c.l.b16 %v1193
      %v1206 = vunpack.c.l.b16 %v1194
      %v1207 = vpack.c.b16 %v1206, %v1205
      %v1210 = vunpack.c.l.b16 %v1201
      %v1211 = vunpack.c.l.b16 %v1202
      %v1212 = vpack.c.b16 %v1211, %v1210
      %1213 = vrot.lane.b32.xlu0 %v1212, 64
      %v1214 = vpop.permute.xlu0 %1213
      %v1217 = vsel %vm883, %v1207, 0
      %1219 = vmatpush.bf16.msra.mxu0 0
      %1220 = vmatpush.bf16.msra.mxu0 0
      %1221 = vmatpush.bf16.msra.mxu0 0
      %1222 = vmatpush.bf16.msra.mxu0 0
      %1223 = vmatpush.bf16.msra.mxu0 0
      %1224 = vmatpush.bf16.msra.mxu0 0
      %1225 = vmatpush.bf16.msra.mxu0 0
      %1226 = vmatpush.bf16.msra.mxu0 %v1214
      %1227 = vmatmul.bf16.gmra.mxu0 %v1217
      %v1228 = vpop.f32.mrf.mxu0
      %v1229 = vadd.f32 0.0, %v1228
      %v1230 = vpop.f32.mrf.mxu0
      %v1231 = vadd.f32 0.0, %v1230
      %1232 = vdwg.mxu0
      %v1233 = vadd.f32 %v1136, %v1229
      %v1234 = vadd.f32 %v1137, %v1231
      %v1235 = vadd.f32 %v1233, %v736
      %v1236 = vadd.f32 %v1234, %v737
      %v1237 = vld [vmem:[%s7 + $0x8] sm:$0x1]
      %v1238 = vld [vmem:[%s7 + $0x9] sm:$0x1]
      %v1239 = vsel %vm438, %v1235, 0.0
      %1240 = vadd.xlane.f32.xlu0 %v1239
      %v1241 = vpop.xlane.xlu0 %1240
      %v1242 = vsel %vm438, %v1236, 0.0
      %1243 = vadd.xlane.f32.xlu0 %v1242
      %v1244 = vpop.xlane.xlu0 %1243
      %v1245 = vmul.f32 %v1241, %v451
      %v1246 = vmul.f32 %v1244, %v451
      %v1247 = vmul.f32 %v1235, %v1235
      %v1248 = vmul.f32 %v1236, %v1236
      %v1249 = vsel %vm438, %v1247, 0.0
      %1250 = vadd.xlane.f32.xlu0 %v1249
      %v1251 = vpop.xlane.xlu0 %1250
      %v1252 = vsel %vm438, %v1248, 0.0
      %1253 = vadd.xlane.f32.xlu0 %v1252
      %v1254 = vpop.xlane.xlu0 %1253
      %v1255 = vmul.f32 %v1251, %v451
      %v1256 = vmul.f32 %v1254, %v451
      %v1257 = vmul.f32 %v1245, %v1245
      %v1258 = vmul.f32 %v1246, %v1246
      %v1259 = vsub.f32 %v1255, %v1257
      %v1260 = vsub.f32 %v1256, %v1258
      %v1261 = vsub.f32 %v1235, %v1245
      %v1262 = vsub.f32 %v1236, %v1246
      %v1263 = vadd.f32 %v1259, 1e-05
      %v1264 = vadd.f32 %v1260, 1e-05
      %v1265 = vrsqrt.pop %v1263
      %v1266 = vmul.f32 %v1265, %v1263
      %v1267 = vmul.f32 %v1266, %v1265
      %v1268 = vmul.f32 0.5, %v1267
      %v1269 = vsub.f32 1.5, %v1268
      %v1270 = vmul.f32 %v1265, %v1269
      %vm1271 = vweird.f32 %v1263
      %vm1272 = vweird.f32 %v1265
      %vm1273 = vmor %vm1271, %vm1272
      %v1274 = vsel %vm1273, %v1265, %v1270
      %v1275 = vrsqrt.pop %v1264
      %v1276 = vmul.f32 %v1275, %v1264
      %v1277 = vmul.f32 %v1276, %v1275
      %v1278 = vmul.f32 0.5, %v1277
      %v1279 = vsub.f32 1.5, %v1278
      %v1280 = vmul.f32 %v1275, %v1279
      %vm1281 = vweird.f32 %v1264
      %vm1282 = vweird.f32 %v1275
      %vm1283 = vmor %vm1281, %vm1282
      %v1284 = vsel %vm1283, %v1275, %v1280
      %v1285 = vmul.f32 %v1261, %v1274
      %v1286 = vmul.f32 %v1262, %v1284
      %v1287 = vperm.slane %v1237, 0
      %v1288 = vmul.f32 %v1285, %v1287
      %v1289 = vmul.f32 %v1286, %v1287
      %v1290 = vperm.slane %v1238, 0
      %v1291 = vadd.f32 %v1288, %v1290
      %v1292 = vadd.f32 %v1289, %v1290
      %v1293 = vld [vmem:[%s6] sm:$0xf]
      %v1294 = vld [vmem:[%s6 + $0x4] sm:$0xf]
      %v1295 = vld [vmem:[%s6 + $0x8] sm:$0xf]
      %v1296 = vld [vmem:[%s6 + $0xc] sm:$0xf]
      %v1297 = vpack.c.bf16 %v1292, %v1291
      %v1298 = vld [vmem:[%s7 + $0xa] sm:$0x1]
      %v1299 = vperm.slane %v1298, 0
      %v1304 = vunpack.c.l.b16 %v1293
      %v1305 = vunpack.c.l.b16 %v1294
      %v1306 = vunpack.c.l.b16 %v1295
      %v1307 = vunpack.c.l.b16 %v1296
      %v1308 = vpack.c.b16 %v1305, %v1304
      %v1309 = vpack.c.b16 %v1307, %v1306
      %v1313 = vsel %vm438, %v1297, 0
      %1315 = vmatpush.bf16.msra.mxu0 0
      %1316 = vmatpush.bf16.msra.mxu0 0
      %1317 = vmatpush.bf16.msra.mxu0 0
      %1318 = vmatpush.bf16.msra.mxu0 0
      %1319 = vmatpush.bf16.msra.mxu0 0
      %1320 = vmatpush.bf16.msra.mxu0 0
      %1321 = vmatpush.bf16.msra.mxu0 %v1309
      %1322 = vmatpush.bf16.msra.mxu0 %v1308
      %1323 = vmatmul.bf16.gmra.mxu0 %v1313
      %v1324 = vpop.f32.mrf.mxu0
      %v1325 = vadd.f32 %v1299, %v1324
      %v1326 = vpop.f32.mrf.mxu0
      %v1327 = vadd.f32 %v1299, %v1326
      %1328 = vdwg.mxu0
      %v1329 = vmax.f32 %v1325, 0.0
      %v1330 = vmax.f32 %v1327, 0.0
      %s1331 = scalar_lea.vmem %s6, 16
      %v1332 = vld [vmem:[%s1331] sm:$0xf]
      %v1333 = vld [vmem:[%s1331 + $0x4] sm:$0xf]
      %v1334 = vld [vmem:[%s1331 + $0x8] sm:$0xf]
      %v1335 = vld [vmem:[%s1331 + $0xc] sm:$0xf]
      %v1336 = vpack.c.bf16 %v1330, %v1329
      %v1337 = vld [vmem:[%s7 + $0xb] sm:$0x1]
      %v1338 = vperm.slane %v1337, 0
      %v1343 = vunpack.c.l.b16 %v1332
      %v1344 = vunpack.c.l.b16 %v1333
      %v1345 = vunpack.c.l.b16 %v1334
      %v1346 = vunpack.c.l.b16 %v1335
      %v1347 = vpack.c.b16 %v1344, %v1343
      %v1348 = vpack.c.b16 %v1346, %v1345
      %v1352 = vsel %vm438, %v1336, 0
      %1354 = vmatpush.bf16.msra.mxu0 0
      %1355 = vmatpush.bf16.msra.mxu0 0
      %1356 = vmatpush.bf16.msra.mxu0 0
      %1357 = vmatpush.bf16.msra.mxu0 0
      %1358 = vmatpush.bf16.msra.mxu0 0
      %1359 = vmatpush.bf16.msra.mxu0 0
      %1360 = vmatpush.bf16.msra.mxu0 %v1348
      %1361 = vmatpush.bf16.msra.mxu0 %v1347
      %1362 = vmatmul.bf16.gmra.mxu0 %v1352
      %v1363 = vpop.f32.mrf.mxu0
      %v1364 = vadd.f32 %v1338, %v1363
      %v1365 = vpop.f32.mrf.mxu0
      %v1366 = vadd.f32 %v1338, %v1365
      %1367 = vdwg.mxu0
      %v1368 = vadd.f32 %v1364, %v1235
      %v1369 = vadd.f32 %v1366, %v1236
      %1370 = vxpose.xlu0.b32.start [1/16] %v1368, 128
      %1371 = vxpose.xlu0.b32.cont [2/16] %v1369, 128
      %1372 = vxpose.xlu0.b32.cont [3/16] 0.0, 128
      %1373 = vxpose.xlu0.b32.cont [4/16] 0.0, 128
      %1374 = vxpose.xlu0.b32.cont [5/16] 0.0, 128
      %1375 = vxpose.xlu0.b32.cont [6/16] 0.0, 128
      %1376 = vxpose.xlu0.b32.cont [7/16] 0.0, 128
      %1377 = vxpose.xlu0.b32.cont [8/16] 0.0, 128
      %1378 = vxpose.xlu0.b32.cont [9/16] 0.0, 128
      %1379 = vxpose.xlu0.b32.cont [10/16] 0.0, 128
      %1380 = vxpose.xlu0.b32.cont [11/16] 0.0, 128
      %1381 = vxpose.xlu0.b32.cont [12/16] 0.0, 128
      %1382 = vxpose.xlu0.b32.cont [13/16] 0.0, 128
      %1383 = vxpose.xlu0.b32.cont [14/16] 0.0, 128
      %1384 = vxpose.xlu0.b32.cont [15/16] 0.0, 128
      %1385 = vxpose.xlu0.b32.end [16/16] 0.0, 128
      %v1386 = vpop.trf.xlu0
      %v1387 = vpop.trf.xlu0
      %v1388 = vpop.trf.xlu0
      %v1389 = vpop.trf.xlu0
      %v1390 = vpop.trf.xlu0
      %v1391 = vpop.trf.xlu0
      %v1392 = vpop.trf.xlu0
      %v1393 = vpop.trf.xlu0
      %v1394 = vpop.trf.xlu0
      %v1395 = vpop.trf.xlu0
      %v1396 = vpop.trf.xlu0
      %v1397 = vpop.trf.xlu0
      %v1398 = vpop.trf.xlu0
      %v1399 = vpop.trf.xlu0
      %v1400 = vpop.trf.xlu0
      %v1401 = vpop.trf.xlu0
      %1402 = vst.msk [vmem:[%s319] sm:$0xff] %vm883, %v1386
      %1403 = vst.msk [vmem:[%s319 + $0x8] sm:$0xff] %vm883, %v1387
      %1404 = vst.msk [vmem:[%s319 + $0x10] sm:$0xff] %vm883, %v1388
      %1405 = vst.msk [vmem:[%s319 + $0x18] sm:$0xff] %vm883, %v1389
      %p1406 = scmp.lt.s32.totalorder %s19, 1
      %s1407 = scalar_select %p1406, %s19, 1
      %s1408 = smul.addr %s1407, 4
      %s1409 = smul.addr %s1408, 8
      %s1410 = scalar_lea.vmem %s8, %s1409
      // Predicated region
      $region53: #{tpu_custom_call.1} parent=51 // pred_check
        %p1411 = pneg %p215
      $region54: #{tpu_custom_call.1} parent=51 // pred_check_branch
        %1413 = sbr.rel (%p1411) target = $region56
      $region55: #{tpu_custom_call.1} parent=51 // pred_region
        _
      $region56: #{tpu_custom_call.1} parent=51 // pred_fallthru
        _
    $region52: #{tpu_custom_call.1} parent=5 // pred_fallthru
      _
    %p1414 = scmp.le.s32.totalorder 2, %s14
    // Predicated region
    $region57: #{tpu_custom_call.1} parent=5 // pred_check
      %p1415 = pneg %p1414
    $region58: #{tpu_custom_call.1} parent=5 // pred_check_branch
      %1417 = sbr.rel (%p1415) target = $region60
    $region59: #{tpu_custom_call.1} parent=5 // pred_region
      %s1418 = ssub.s32 %s14, 2
      // Predicated region
      $region61: #{tpu_custom_call.1} parent=59 // pred_check
        %p1419 = pneg %p221
      $region62: #{tpu_custom_call.1} parent=59 // pred_check_branch
        %1421 = sbr.rel (%p1419) target = $region64
      $region63: #{tpu_custom_call.1} parent=59 // pred_region
        %p1422 = scmp.lt.s32.totalorder %s20, 1
        %s1423 = scalar_select %p1422, %s20, 1
        %s1424 = smul.addr %s1423, 4
        %s1425 = smul.addr %s1424, 8
        %s1426 = scalar_lea.vmem %s8, %s1425
      $region64: #{tpu_custom_call.1} parent=59 // pred_fallthru
        _
    $region60: #{tpu_custom_call.1} parent=5 // pred_fallthru
      _
  $region6: #{tpu_custom_call.1} parent=0 // loop_footer
    %s18 = sadd.s32 1, %s14
  $region7: #{tpu_custom_call.1} parent=0 // loop_footer_branch
    %13 = sbr.rel target = $region3
  $region8: #{tpu_custom_call.1} parent=0 // loop_exit
    _

</llo_original>
